<compile_context>
chip_gen: v5e
topology: v5e:2x2
jax: 0.10.0
libtpu: 0.0.40
codegen_flags: <defaults>
</compile_context>

<pallas_src>
import math

import jax
import jax.numpy as jnp
from jax.experimental import pallas as pl
from jax.experimental.pallas import tpu as pltpu


# ---------------------------------------------------------------------------
# Pruned Batcher odd-even selection network (lower median of 49 taps).
# ---------------------------------------------------------------------------
_INF = object()    # trace-time stand-in for +inf padding wires (never materialized)
_DEAD = object()   # trace-time stand-in for pruned (never-read) wires


def _oddeven_merge(lo, hi, r, pairs):
    step = r * 2
    if step < hi - lo:
        _oddeven_merge(lo, hi, step, pairs)
        _oddeven_merge(lo + r, hi, step, pairs)
        for i in range(lo + r, hi - r, step):
            pairs.append((i, i + r))
    else:
        pairs.append((lo, lo + r))


def _oddeven_merge_sort(lo, hi, pairs):
    if hi - lo >= 1:
        mid = lo + (hi - lo) // 2
        _oddeven_merge_sort(lo, mid, pairs)
        _oddeven_merge_sort(mid + 1, hi, pairs)
        _oddeven_merge(lo, hi, 1, pairs)


def _selection_plan(n_real, k):
    """Sorting network over next_pow2(n_real) wires, pruned (backward dataflow walk)
    to only the compare-exchanges that can influence output wire k."""
    n = 1
    while n < n_real:
        n *= 2
    pairs = []
    _oddeven_merge_sort(0, n - 1, pairs)
    needed = {k}
    plan = []
    for i, j in reversed(pairs):
        need_min, need_max = i in needed, j in needed
        if not (need_min or need_max):
            continue
        plan.append((i, j, need_min, need_max))
        needed.add(i)
        needed.add(j)
    plan.reverse()
    return n, plan


def _select_kth(values, k, minimum=jnp.minimum, maximum=jnp.maximum):
    """k-th smallest (0-based, elementwise over arrays) of `values` via a pruned
    compare-exchange selection network."""
    n, plan = _selection_plan(len(values), k)
    wires = list(values) + [_INF] * (n - len(values))
    for i, j, need_min, need_max in plan:
        a, b = wires[i], wires[j]
        if b is _INF:                  # min(a, +inf) = a, max = +inf: no ops emitted
            continue
        if a is _INF:                  # min = b, max = +inf: swap, no ops emitted
            wires[i], wires[j] = b, _INF
            continue
        wires[i] = minimum(a, b) if need_min else _DEAD
        wires[j] = maximum(a, b) if need_max else _DEAD
    assert wires[k] is not _INF and wires[k] is not _DEAD
    return wires[k]


def _check_selection_network():
    """Cheap trace-time self-test of the pruned network on plain Python floats."""
    import random as _random
    rng = _random.Random(0)
    for _ in range(8):
        vals = [rng.uniform(-10.0, 10.0) for _ in range(49)]
        got = _select_kth(list(vals), 24, minimum=min, maximum=max)
        assert got == sorted(vals)[24], "selection network self-test failed"


# ---------------------------------------------------------------------------
# Kernel 1: 7x7 median pool, "same" reflect padding, stride 1.
# ---------------------------------------------------------------------------
def median_pool_7x7_same(adv_patch):
    """adv_patch: (C, P, P) float32 -> pooled patch laid out as (P, C*P):
    out[y, c*P + x] = median of the 7x7 reflect-padded window of channel c at (y, x)."""
    C, P, _ = adv_patch.shape
    xp = jnp.pad(adv_patch.astype(jnp.float32), ((0, 0), (3, 3), (3, 3)),
                 mode="reflect")                                      # (C, P+6, P+6)
    # Pre-shift the 7 horizontal (dx) taps and fold channels onto the lane axis so
    # every in-kernel tap is a plain (P, C*P) 2-D slice: no in-kernel reshapes and
    # C*P lanes per vreg instead of P (lane-denser selection math).
    xds = jnp.stack([xp[:, :, dx:dx + P] for dx in range(7)], axis=0)  # (7, C, P+6, P)
    xds = jnp.transpose(xds, (0, 2, 1, 3)).reshape(7, P + 6, C * P)    # (7, P+6, C*P)

    def kernel(x_ref, out_ref):
        # x_ref: (7, P+6, C*P); out_ref: (P, C*P).  49 taps, each a static slice.
        taps = [x_ref[dx, dy:dy + P, :] for dy in range(7) for dx in range(7)]
        # lower median (rank 24 of 49) == torch.median for an odd tap count
        out_ref[...] = _select_kth(taps, len(taps) // 2)

    return pl.pallas_call(
        kernel,
        out_shape=jax.ShapeDtypeStruct((P, C * P), jnp.float32),
        grid=(1,),                                   # single step: no megacore imbalance
        in_specs=[pl.BlockSpec((7, P + 6, C * P), lambda i: (0, 0, 0))],
        out_specs=pl.BlockSpec((P, C * P), lambda i: (0, 0)),
        compiler_params=pltpu.CompilerParams(dimension_semantics=("arbitrary",)),
    )(xds)


# ---------------------------------------------------------------------------
# Full forward pass.
# ---------------------------------------------------------------------------
def patch_transformer_forward(adv_patch, lab_batch, model_in_sz, key,
                              target_size_frac=0.35,
                              do_transforms=True, do_rotate=True, rand_loc=True,
                              labels_per_step=4):
    adv_patch = adv_patch.astype(jnp.float32)
    lab_batch = lab_batch.astype(jnp.float32)
    m_h, m_w = model_in_sz   # like the torch code, geometry/scaling uses m_w only
    C, P, _ = adv_patch.shape
    B, L = lab_batch.shape[0], lab_batch.shape[1]
    N = B * L

    # --- Kernel 1: median pooled patch, reshaped to the matmul LHS layout ----
    pooled = median_pool_7x7_same(adv_patch)                 # (P, C*P)
    patch2d = pooled.reshape(P, C, P).transpose(1, 0, 2).reshape(C * P, P)   # (C*P, P)

    # --- geometry (mirrors the torch scalar code) -----------------------------
    pad = (m_w - P) / 2
    left = int(pad + 0.5)
    right = int(pad)
    top = int(pad + 0.5)
    S = P + left + right              # padded canvas == grid_sample output size
    HW = S * S

    # --- randomness (torch .uniform_ -> jax.random; not bitwise identical) ----
    k = jax.random.split(key, 5)
    if do_transforms:
        contrast = jax.random.uniform(k[0], (N,), minval=0.8, maxval=1.2)
        brightness = jax.random.uniform(k[1], (N,), minval=-0.1, maxval=0.1)
    else:
        contrast = jnp.ones((N,), jnp.float32)
        brightness = jnp.zeros((N,), jnp.float32)
    if do_rotate:
        angle = jax.random.uniform(k[2], (N,), minval=-20 / 180 * math.pi,
                                   maxval=20 / 180 * math.pi)
    else:
        angle = jnp.zeros((N,), jnp.float32)

    # NOTE: mirrors torch (msk = 1 - cls_id); assumes class ids are in {0, 1}.
    one_minus_cls = 1.0 - lab_batch[:, :, 0].reshape(N)

    w_scaled = lab_batch[:, :, 3].reshape(N) * m_w
    h_scaled = lab_batch[:, :, 4].reshape(N) * m_w
    target_size = jnp.sqrt((w_scaled * target_size_frac) ** 2 +
                           (h_scaled * target_size_frac) ** 2)
    target_x = lab_batch[:, :, 1].reshape(N)
    target_y = lab_batch[:, :, 2].reshape(N)
    toff_x = lab_batch[:, :, 3].reshape(N)
    toff_y = lab_batch[:, :, 4].reshape(N)
    if rand_loc:
        target_x = target_x + toff_x * jax.random.uniform(k[3], (N,), minval=-0.4, maxval=0.4)
        target_y = target_y + toff_y * jax.random.uniform(k[4], (N,), minval=-0.4, maxval=0.4)

    # Padded labels with w == h == 0 would give scale == 0 -> inf/NaN theta that the
    # final 0-mask multiply does NOT sanitize; clamp the scale to epsilon.
    scale = jnp.maximum(target_size / P, 1e-6)
    tx = (-target_x + 0.5) * 2.0
    ty = (-target_y + 0.5) * 2.0
    sin, cos = jnp.sin(angle), jnp.cos(angle)
    # (9, N): long axis last so the 2-D SMEM block pads to a few KiB, not ~13x raw.
    params = jnp.stack([contrast, brightness, one_minus_cls,
                        cos / scale, sin / scale, (tx * cos + ty * sin) / scale,
                        -sin / scale, cos / scale, (-tx * sin + ty * cos) / scale],
                       axis=0).astype(jnp.float32)

    # --- labels-per-grid-step --------------------------------------------------
    # >= 2 grid steps when possible so both v7x TensorCores get work; a larger TN
    # amortizes the ~0.35us/step overhead on single-TC v5e/v6e.
    TN = max(1, min(int(labels_per_step), N))
    num_steps = pl.cdiv(N, TN)
    if num_steps < 2 and N > 1:
        TN = pl.cdiv(N, 2)
        num_steps = pl.cdiv(N, TN)
    N_pad = num_steps * TN
    if N_pad > N:
        params = jnp.pad(params, ((0, 0), (0, N_pad - N)))  # zero theta/mask -> finite, masked

    # grid-invariant normalized output coords (F.affine_grid, align_corners=False),
    # precomputed once and kept resident in VMEM via a constant index_map.
    p_idx = jnp.arange(HW, dtype=jnp.int32)
    u = (2.0 * (p_idx % S).astype(jnp.float32) + 1.0) / S - 1.0
    v = (2.0 * (p_idx // S).astype(jnp.float32) + 1.0) / S - 1.0
    uv = jnp.stack([u, v], axis=0)                          # (2, HW)

    noise_factor = 0.1
    inputs = [params, patch2d, uv]
    in_specs = [
        pl.BlockSpec(memory_space=pltpu.MemorySpace.SMEM),   # params (9, N_pad)
        pl.BlockSpec((C * P, P), lambda s: (0, 0)),          # shared patch, resident
        pl.BlockSpec((2, HW), lambda s: (0, 0)),             # shared (u, v), resident
    ]
    if do_transforms:
        # TODO(synk): on a TPU-only path this could be pltpu.prng_random_bits inside the
        # kernel (no HBM noise stream), but those primitives have no CPU/interpret lowering.
        noise = jax.random.uniform(jax.random.fold_in(key, 7), (N_pad, C * P, P),
                                   minval=-1.0, maxval=1.0) * noise_factor
        inputs.append(noise)
        in_specs.append(pl.BlockSpec((TN, C * P, P), lambda s: (s, 0, 0)))

    # TODO(synk): at detector-scale S (416/640) add a second grid axis tiling HW in
    # multiples of 128 (roughly half-size tiles on v7x's 64 MiB VMEM vs v5e/v6e's 128 MiB).
    def transform_kernel(params_ref, patch_ref, uv_ref, *rest):
        if do_transforms:
            noise_ref, out_ref = rest
        else:
            (out_ref,) = rest
        step = pl.program_id(0)
        patch = patch_ref[...]                               # (C*P, P)
        uu = uv_ref[0:1, :]                                  # (1, HW)
        vv = uv_ref[1:2, :]                                  # (1, HW)
        # patch row/col positions (left == top, so one iota serves both axes);
        # kept as (P, 1) and broadcast against the (1, HW) sample coords.
        pos = jax.lax.broadcasted_iota(jnp.int32, (P, 1), 0).astype(jnp.float32)

        def body(i, carry):
            n = step * TN + i
            omc = params_ref[2, n]
            a00 = params_ref[3, n]; a01 = params_ref[4, n]; a02 = params_ref[5, n]
            a10 = params_ref[6, n]; a11 = params_ref[7, n]; a12 = params_ref[8, n]
            if do_transforms:
                con = params_ref[0, n]
                bri = params_ref[1, n]
                adv = jnp.clip(patch * con + bri + noise_ref[i], 1e-6, 0.99999)
            else:
                adv = patch

            # F.affine_grid + F.grid_sample (bilinear, zeros, align_corners=False),
            # restricted to the P x P support of the zero-padded canvas.
            xs = a00 * uu + a01 * vv + a02                   # (1, HW)
            ys = a10 * uu + a11 * vv + a12
            ix = ((xs + 1.0) * S - 1.0) * 0.5 - left         # source col (patch coords)
            iy = ((ys + 1.0) * S - 1.0) * 0.5 - top          # source row (patch coords)
            wx = jnp.maximum(0.0, 1.0 - jnp.abs(ix - pos))   # (P, HW)
            wy = jnp.maximum(0.0, 1.0 - jnp.abs(iy - pos))   # (P, HW)

            # one MXU matmul over all channels: (C*P, P) @ (P, HW), then a fused
            # reshape/multiply/reduce epilogue (no per-channel slices / concatenate)
            t = jnp.dot(adv, wx, preferred_element_type=jnp.float32)         # (C*P, HW)
            adv_t = jnp.sum(t.reshape(C, P, HW) * wy[None, :, :], axis=1)    # (C, HW)

            # grid-sampled mask of the patch region, analytic (separable hat sums)
            msk_t = (jnp.sum(wx, axis=0, keepdims=True) *
                     jnp.sum(wy, axis=0, keepdims=True)) * omc               # (1, HW)

            out_ref[i] = jnp.clip(adv_t, 1e-6, 0.999999) * msk_t
            return carry

        jax.lax.fori_loop(0, TN, body, 0, unroll=True)

    out = pl.pallas_call(
        transform_kernel,
        out_shape=jax.ShapeDtypeStruct((N_pad, C, HW), jnp.float32),
        grid=(num_steps,),
        in_specs=in_specs,
        out_specs=pl.BlockSpec((TN, C, HW), lambda s: (s, 0, 0)),
        compiler_params=pltpu.CompilerParams(
            dimension_semantics=("parallel",),               # label blocks independent
            vmem_limit_bytes=64 * 1024 * 1024),
    )(*inputs)

    return out[:N].reshape(B, L, C, S, S)


if __name__ == "__main__":
    _check_selection_network()

    key = jax.random.PRNGKey(0)
    kp, kl, kr = jax.random.split(key, 3)

    C, P = 3, 16
    B, L = 2, 3
    model_in_sz = (32, 32)

    adv_patch = jax.random.uniform(kp, (C, P, P), minval=0.0, maxval=1.0,
                                   dtype=jnp.float32)

    # labels: [cls_id, x, y, w, h]; cls 0 = real target, cls 1 = padded row
    cls_ids = jnp.array([[0.0, 0.0, 1.0],
                         [0.0, 1.0, 1.0]], dtype=jnp.float32)
    xywh = jax.random.uniform(kl, (B, L, 4), minval=0.25, maxval=0.75,
                              dtype=jnp.float32)
    lab_batch = jnp.concatenate([cls_ids[..., None], xywh], axis=-1)

    out = patch_transformer_forward(adv_patch, lab_batch, model_in_sz, kr,
                                    do_transforms=True, do_rotate=True,
                                    rand_loc=True)
    out = jax.block_until_ready(out)
    assert out.shape == (B, L, C, model_in_sz[1], model_in_sz[1]), out.shape
    assert bool(jnp.all(jnp.isfinite(out)))
    print("KERNEL_OK")
</pallas_src>

<mosaic_0001>
module attributes {stable_mosaic.version = 11 : i64} {
  func.func @kernel(%arg0: i32, %arg1: memref<7x22x48xf32, #tpu.memory_space<vmem>>, %arg2: memref<16x48xf32, #tpu.memory_space<vmem>>) attributes {dimension_semantics = [#tpu.dimension_semantics<arbitrary>], iteration_bounds = array<i64: 1>, scalar_prefetch = 0 : i64, scratch_operands = 0 : i64, tpu.core_type = #tpu.core_type<tc>, window_params = [{pipeline_mode = #tpu.pipeline_mode<synchronous>, transform_indices = @transform_0, window_bounds = array<i64: 7, 22, 48>}, {pipeline_mode = #tpu.pipeline_mode<synchronous>, transform_indices = @transform_1, window_bounds = array<i64: 16, 48>}]} {
    %c0 = arith.constant 0 : index
    %c0_0 = arith.constant 0 : index
    %c0_1 = arith.constant 0 : index
    %0 = vector.load %arg1[%c0, %c0_0, %c0_1] : memref<7x22x48xf32, #tpu.memory_space<vmem>>, vector<1x16x48xf32>
    %1 = vector.shape_cast %0 : vector<1x16x48xf32> to vector<16x48xf32>
    %c1 = arith.constant 1 : index
    %c0_2 = arith.constant 0 : index
    %c0_3 = arith.constant 0 : index
    %2 = vector.load %arg1[%c1, %c0_2, %c0_3] : memref<7x22x48xf32, #tpu.memory_space<vmem>>, vector<1x16x48xf32>
    %3 = vector.shape_cast %2 : vector<1x16x48xf32> to vector<16x48xf32>
    %c2 = arith.constant 2 : index
    %c0_4 = arith.constant 0 : index
    %c0_5 = arith.constant 0 : index
    %4 = vector.load %arg1[%c2, %c0_4, %c0_5] : memref<7x22x48xf32, #tpu.memory_space<vmem>>, vector<1x16x48xf32>
    %5 = vector.shape_cast %4 : vector<1x16x48xf32> to vector<16x48xf32>
    %c3 = arith.constant 3 : index
    %c0_6 = arith.constant 0 : index
    %c0_7 = arith.constant 0 : index
    %6 = vector.load %arg1[%c3, %c0_6, %c0_7] : memref<7x22x48xf32, #tpu.memory_space<vmem>>, vector<1x16x48xf32>
    %7 = vector.shape_cast %6 : vector<1x16x48xf32> to vector<16x48xf32>
    %c4 = arith.constant 4 : index
    %c0_8 = arith.constant 0 : index
    %c0_9 = arith.constant 0 : index
    %8 = vector.load %arg1[%c4, %c0_8, %c0_9] : memref<7x22x48xf32, #tpu.memory_space<vmem>>, vector<1x16x48xf32>
    %9 = vector.shape_cast %8 : vector<1x16x48xf32> to vector<16x48xf32>
    %c5 = arith.constant 5 : index
    %c0_10 = arith.constant 0 : index
    %c0_11 = arith.constant 0 : index
    %10 = vector.load %arg1[%c5, %c0_10, %c0_11] : memref<7x22x48xf32, #tpu.memory_space<vmem>>, vector<1x16x48xf32>
    %11 = vector.shape_cast %10 : vector<1x16x48xf32> to vector<16x48xf32>
    %c6 = arith.constant 6 : index
    %c0_12 = arith.constant 0 : index
    %c0_13 = arith.constant 0 : index
    %12 = vector.load %arg1[%c6, %c0_12, %c0_13] : memref<7x22x48xf32, #tpu.memory_space<vmem>>, vector<1x16x48xf32>
    %13 = vector.shape_cast %12 : vector<1x16x48xf32> to vector<16x48xf32>
    %c0_14 = arith.constant 0 : index
    %c1_15 = arith.constant 1 : index
    %c0_16 = arith.constant 0 : index
    %14 = vector.load %arg1[%c0_14, %c1_15, %c0_16] : memref<7x22x48xf32, #tpu.memory_space<vmem>>, vector<1x16x48xf32>
    %15 = vector.shape_cast %14 : vector<1x16x48xf32> to vector<16x48xf32>
    %c1_17 = arith.constant 1 : index
    %c1_18 = arith.constant 1 : index
    %c0_19 = arith.constant 0 : index
    %16 = vector.load %arg1[%c1_17, %c1_18, %c0_19] : memref<7x22x48xf32, #tpu.memory_space<vmem>>, vector<1x16x48xf32>
    %17 = vector.shape_cast %16 : vector<1x16x48xf32> to vector<16x48xf32>
    %c2_20 = arith.constant 2 : index
    %c1_21 = arith.constant 1 : index
    %c0_22 = arith.constant 0 : index
    %18 = vector.load %arg1[%c2_20, %c1_21, %c0_22] : memref<7x22x48xf32, #tpu.memory_space<vmem>>, vector<1x16x48xf32>
    %19 = vector.shape_cast %18 : vector<1x16x48xf32> to vector<16x48xf32>
    %c3_23 = arith.constant 3 : index
    %c1_24 = arith.constant 1 : index
    %c0_25 = arith.constant 0 : index
    %20 = vector.load %arg1[%c3_23, %c1_24, %c0_25] : memref<7x22x48xf32, #tpu.memory_space<vmem>>, vector<1x16x48xf32>
    %21 = vector.shape_cast %20 : vector<1x16x48xf32> to vector<16x48xf32>
    %c4_26 = arith.constant 4 : index
    %c1_27 = arith.constant 1 : index
    %c0_28 = arith.constant 0 : index
    %22 = vector.load %arg1[%c4_26, %c1_27, %c0_28] : memref<7x22x48xf32, #tpu.memory_space<vmem>>, vector<1x16x48xf32>
    %23 = vector.shape_cast %22 : vector<1x16x48xf32> to vector<16x48xf32>
    %c5_29 = arith.constant 5 : index
    %c1_30 = arith.constant 1 : index
    %c0_31 = arith.constant 0 : index
    %24 = vector.load %arg1[%c5_29, %c1_30, %c0_31] : memref<7x22x48xf32, #tpu.memory_space<vmem>>, vector<1x16x48xf32>
    %25 = vector.shape_cast %24 : vector<1x16x48xf32> to vector<16x48xf32>
    %c6_32 = arith.constant 6 : index
    %c1_33 = arith.constant 1 : index
    %c0_34 = arith.constant 0 : index
    %26 = vector.load %arg1[%c6_32, %c1_33, %c0_34] : memref<7x22x48xf32, #tpu.memory_space<vmem>>, vector<1x16x48xf32>
    %27 = vector.shape_cast %26 : vector<1x16x48xf32> to vector<16x48xf32>
    %c0_35 = arith.constant 0 : index
    %c2_36 = arith.constant 2 : index
    %c0_37 = arith.constant 0 : index
    %28 = vector.load %arg1[%c0_35, %c2_36, %c0_37] : memref<7x22x48xf32, #tpu.memory_space<vmem>>, vector<1x16x48xf32>
    %29 = vector.shape_cast %28 : vector<1x16x48xf32> to vector<16x48xf32>
    %c1_38 = arith.constant 1 : index
    %c2_39 = arith.constant 2 : index
    %c0_40 = arith.constant 0 : index
    %30 = vector.load %arg1[%c1_38, %c2_39, %c0_40] : memref<7x22x48xf32, #tpu.memory_space<vmem>>, vector<1x16x48xf32>
    %31 = vector.shape_cast %30 : vector<1x16x48xf32> to vector<16x48xf32>
    %c2_41 = arith.constant 2 : index
    %c2_42 = arith.constant 2 : index
    %c0_43 = arith.constant 0 : index
    %32 = vector.load %arg1[%c2_41, %c2_42, %c0_43] : memref<7x22x48xf32, #tpu.memory_space<vmem>>, vector<1x16x48xf32>
    %33 = vector.shape_cast %32 : vector<1x16x48xf32> to vector<16x48xf32>
    %c3_44 = arith.constant 3 : index
    %c2_45 = arith.constant 2 : index
    %c0_46 = arith.constant 0 : index
    %34 = vector.load %arg1[%c3_44, %c2_45, %c0_46] : memref<7x22x48xf32, #tpu.memory_space<vmem>>, vector<1x16x48xf32>
    %35 = vector.shape_cast %34 : vector<1x16x48xf32> to vector<16x48xf32>
    %c4_47 = arith.constant 4 : index
    %c2_48 = arith.constant 2 : index
    %c0_49 = arith.constant 0 : index
    %36 = vector.load %arg1[%c4_47, %c2_48, %c0_49] : memref<7x22x48xf32, #tpu.memory_space<vmem>>, vector<1x16x48xf32>
    %37 = vector.shape_cast %36 : vector<1x16x48xf32> to vector<16x48xf32>
    %c5_50 = arith.constant 5 : index
    %c2_51 = arith.constant 2 : index
    %c0_52 = arith.constant 0 : index
    %38 = vector.load %arg1[%c5_50, %c2_51, %c0_52] : memref<7x22x48xf32, #tpu.memory_space<vmem>>, vector<1x16x48xf32>
    %39 = vector.shape_cast %38 : vector<1x16x48xf32> to vector<16x48xf32>
    %c6_53 = arith.constant 6 : index
    %c2_54 = arith.constant 2 : index
    %c0_55 = arith.constant 0 : index
    %40 = vector.load %arg1[%c6_53, %c2_54, %c0_55] : memref<7x22x48xf32, #tpu.memory_space<vmem>>, vector<1x16x48xf32>
    %41 = vector.shape_cast %40 : vector<1x16x48xf32> to vector<16x48xf32>
    %c0_56 = arith.constant 0 : index
    %c3_57 = arith.constant 3 : index
    %c0_58 = arith.constant 0 : index
    %42 = vector.load %arg1[%c0_56, %c3_57, %c0_58] : memref<7x22x48xf32, #tpu.memory_space<vmem>>, vector<1x16x48xf32>
    %43 = vector.shape_cast %42 : vector<1x16x48xf32> to vector<16x48xf32>
    %c1_59 = arith.constant 1 : index
    %c3_60 = arith.constant 3 : index
    %c0_61 = arith.constant 0 : index
    %44 = vector.load %arg1[%c1_59, %c3_60, %c0_61] : memref<7x22x48xf32, #tpu.memory_space<vmem>>, vector<1x16x48xf32>
    %45 = vector.shape_cast %44 : vector<1x16x48xf32> to vector<16x48xf32>
    %c2_62 = arith.constant 2 : index
    %c3_63 = arith.constant 3 : index
    %c0_64 = arith.constant 0 : index
    %46 = vector.load %arg1[%c2_62, %c3_63, %c0_64] : memref<7x22x48xf32, #tpu.memory_space<vmem>>, vector<1x16x48xf32>
    %47 = vector.shape_cast %46 : vector<1x16x48xf32> to vector<16x48xf32>
    %c3_65 = arith.constant 3 : index
    %c3_66 = arith.constant 3 : index
    %c0_67 = arith.constant 0 : index
    %48 = vector.load %arg1[%c3_65, %c3_66, %c0_67] : memref<7x22x48xf32, #tpu.memory_space<vmem>>, vector<1x16x48xf32>
    %49 = vector.shape_cast %48 : vector<1x16x48xf32> to vector<16x48xf32>
    %c4_68 = arith.constant 4 : index
    %c3_69 = arith.constant 3 : index
    %c0_70 = arith.constant 0 : index
    %50 = vector.load %arg1[%c4_68, %c3_69, %c0_70] : memref<7x22x48xf32, #tpu.memory_space<vmem>>, vector<1x16x48xf32>
    %51 = vector.shape_cast %50 : vector<1x16x48xf32> to vector<16x48xf32>
    %c5_71 = arith.constant 5 : index
    %c3_72 = arith.constant 3 : index
    %c0_73 = arith.constant 0 : index
    %52 = vector.load %arg1[%c5_71, %c3_72, %c0_73] : memref<7x22x48xf32, #tpu.memory_space<vmem>>, vector<1x16x48xf32>
    %53 = vector.shape_cast %52 : vector<1x16x48xf32> to vector<16x48xf32>
    %c6_74 = arith.constant 6 : index
    %c3_75 = arith.constant 3 : index
    %c0_76 = arith.constant 0 : index
    %54 = vector.load %arg1[%c6_74, %c3_75, %c0_76] : memref<7x22x48xf32, #tpu.memory_space<vmem>>, vector<1x16x48xf32>
    %55 = vector.shape_cast %54 : vector<1x16x48xf32> to vector<16x48xf32>
    %c0_77 = arith.constant 0 : index
    %c4_78 = arith.constant 4 : index
    %c0_79 = arith.constant 0 : index
    %56 = vector.load %arg1[%c0_77, %c4_78, %c0_79] : memref<7x22x48xf32, #tpu.memory_space<vmem>>, vector<1x16x48xf32>
    %57 = vector.shape_cast %56 : vector<1x16x48xf32> to vector<16x48xf32>
    %c1_80 = arith.constant 1 : index
    %c4_81 = arith.constant 4 : index
    %c0_82 = arith.constant 0 : index
    %58 = vector.load %arg1[%c1_80, %c4_81, %c0_82] : memref<7x22x48xf32, #tpu.memory_space<vmem>>, vector<1x16x48xf32>
    %59 = vector.shape_cast %58 : vector<1x16x48xf32> to vector<16x48xf32>
    %c2_83 = arith.constant 2 : index
    %c4_84 = arith.constant 4 : index
    %c0_85 = arith.constant 0 : index
    %60 = vector.load %arg1[%c2_83, %c4_84, %c0_85] : memref<7x22x48xf32, #tpu.memory_space<vmem>>, vector<1x16x48xf32>
    %61 = vector.shape_cast %60 : vector<1x16x48xf32> to vector<16x48xf32>
    %c3_86 = arith.constant 3 : index
    %c4_87 = arith.constant 4 : index
    %c0_88 = arith.constant 0 : index
    %62 = vector.load %arg1[%c3_86, %c4_87, %c0_88] : memref<7x22x48xf32, #tpu.memory_space<vmem>>, vector<1x16x48xf32>
    %63 = vector.shape_cast %62 : vector<1x16x48xf32> to vector<16x48xf32>
    %c4_89 = arith.constant 4 : index
    %c4_90 = arith.constant 4 : index
    %c0_91 = arith.constant 0 : index
    %64 = vector.load %arg1[%c4_89, %c4_90, %c0_91] : memref<7x22x48xf32, #tpu.memory_space<vmem>>, vector<1x16x48xf32>
    %65 = vector.shape_cast %64 : vector<1x16x48xf32> to vector<16x48xf32>
    %c5_92 = arith.constant 5 : index
    %c4_93 = arith.constant 4 : index
    %c0_94 = arith.constant 0 : index
    %66 = vector.load %arg1[%c5_92, %c4_93, %c0_94] : memref<7x22x48xf32, #tpu.memory_space<vmem>>, vector<1x16x48xf32>
    %67 = vector.shape_cast %66 : vector<1x16x48xf32> to vector<16x48xf32>
    %c6_95 = arith.constant 6 : index
    %c4_96 = arith.constant 4 : index
    %c0_97 = arith.constant 0 : index
    %68 = vector.load %arg1[%c6_95, %c4_96, %c0_97] : memref<7x22x48xf32, #tpu.memory_space<vmem>>, vector<1x16x48xf32>
    %69 = vector.shape_cast %68 : vector<1x16x48xf32> to vector<16x48xf32>
    %c0_98 = arith.constant 0 : index
    %c5_99 = arith.constant 5 : index
    %c0_100 = arith.constant 0 : index
    %70 = vector.load %arg1[%c0_98, %c5_99, %c0_100] : memref<7x22x48xf32, #tpu.memory_space<vmem>>, vector<1x16x48xf32>
    %71 = vector.shape_cast %70 : vector<1x16x48xf32> to vector<16x48xf32>
    %c1_101 = arith.constant 1 : index
    %c5_102 = arith.constant 5 : index
    %c0_103 = arith.constant 0 : index
    %72 = vector.load %arg1[%c1_101, %c5_102, %c0_103] : memref<7x22x48xf32, #tpu.memory_space<vmem>>, vector<1x16x48xf32>
    %73 = vector.shape_cast %72 : vector<1x16x48xf32> to vector<16x48xf32>
    %c2_104 = arith.constant 2 : index
    %c5_105 = arith.constant 5 : index
    %c0_106 = arith.constant 0 : index
    %74 = vector.load %arg1[%c2_104, %c5_105, %c0_106] : memref<7x22x48xf32, #tpu.memory_space<vmem>>, vector<1x16x48xf32>
    %75 = vector.shape_cast %74 : vector<1x16x48xf32> to vector<16x48xf32>
    %c3_107 = arith.constant 3 : index
    %c5_108 = arith.constant 5 : index
    %c0_109 = arith.constant 0 : index
    %76 = vector.load %arg1[%c3_107, %c5_108, %c0_109] : memref<7x22x48xf32, #tpu.memory_space<vmem>>, vector<1x16x48xf32>
    %77 = vector.shape_cast %76 : vector<1x16x48xf32> to vector<16x48xf32>
    %c4_110 = arith.constant 4 : index
    %c5_111 = arith.constant 5 : index
    %c0_112 = arith.constant 0 : index
    %78 = vector.load %arg1[%c4_110, %c5_111, %c0_112] : memref<7x22x48xf32, #tpu.memory_space<vmem>>, vector<1x16x48xf32>
    %79 = vector.shape_cast %78 : vector<1x16x48xf32> to vector<16x48xf32>
    %c5_113 = arith.constant 5 : index
    %c5_114 = arith.constant 5 : index
    %c0_115 = arith.constant 0 : index
    %80 = vector.load %arg1[%c5_113, %c5_114, %c0_115] : memref<7x22x48xf32, #tpu.memory_space<vmem>>, vector<1x16x48xf32>
    %81 = vector.shape_cast %80 : vector<1x16x48xf32> to vector<16x48xf32>
    %c6_116 = arith.constant 6 : index
    %c5_117 = arith.constant 5 : index
    %c0_118 = arith.constant 0 : index
    %82 = vector.load %arg1[%c6_116, %c5_117, %c0_118] : memref<7x22x48xf32, #tpu.memory_space<vmem>>, vector<1x16x48xf32>
    %83 = vector.shape_cast %82 : vector<1x16x48xf32> to vector<16x48xf32>
    %c0_119 = arith.constant 0 : index
    %c6_120 = arith.constant 6 : index
    %c0_121 = arith.constant 0 : index
    %84 = vector.load %arg1[%c0_119, %c6_120, %c0_121] : memref<7x22x48xf32, #tpu.memory_space<vmem>>, vector<1x16x48xf32>
    %85 = vector.shape_cast %84 : vector<1x16x48xf32> to vector<16x48xf32>
    %c1_122 = arith.constant 1 : index
    %c6_123 = arith.constant 6 : index
    %c0_124 = arith.constant 0 : index
    %86 = vector.load %arg1[%c1_122, %c6_123, %c0_124] : memref<7x22x48xf32, #tpu.memory_space<vmem>>, vector<1x16x48xf32>
    %87 = vector.shape_cast %86 : vector<1x16x48xf32> to vector<16x48xf32>
    %c2_125 = arith.constant 2 : index
    %c6_126 = arith.constant 6 : index
    %c0_127 = arith.constant 0 : index
    %88 = vector.load %arg1[%c2_125, %c6_126, %c0_127] : memref<7x22x48xf32, #tpu.memory_space<vmem>>, vector<1x16x48xf32>
    %89 = vector.shape_cast %88 : vector<1x16x48xf32> to vector<16x48xf32>
    %c3_128 = arith.constant 3 : index
    %c6_129 = arith.constant 6 : index
    %c0_130 = arith.constant 0 : index
    %90 = vector.load %arg1[%c3_128, %c6_129, %c0_130] : memref<7x22x48xf32, #tpu.memory_space<vmem>>, vector<1x16x48xf32>
    %91 = vector.shape_cast %90 : vector<1x16x48xf32> to vector<16x48xf32>
    %c4_131 = arith.constant 4 : index
    %c6_132 = arith.constant 6 : index
    %c0_133 = arith.constant 0 : index
    %92 = vector.load %arg1[%c4_131, %c6_132, %c0_133] : memref<7x22x48xf32, #tpu.memory_space<vmem>>, vector<1x16x48xf32>
    %93 = vector.shape_cast %92 : vector<1x16x48xf32> to vector<16x48xf32>
    %c5_134 = arith.constant 5 : index
    %c6_135 = arith.constant 6 : index
    %c0_136 = arith.constant 0 : index
    %94 = vector.load %arg1[%c5_134, %c6_135, %c0_136] : memref<7x22x48xf32, #tpu.memory_space<vmem>>, vector<1x16x48xf32>
    %95 = vector.shape_cast %94 : vector<1x16x48xf32> to vector<16x48xf32>
    %c6_137 = arith.constant 6 : index
    %c6_138 = arith.constant 6 : index
    %c0_139 = arith.constant 0 : index
    %96 = vector.load %arg1[%c6_137, %c6_138, %c0_139] : memref<7x22x48xf32, #tpu.memory_space<vmem>>, vector<1x16x48xf32>
    %97 = vector.shape_cast %96 : vector<1x16x48xf32> to vector<16x48xf32>
    %98 = arith.minimumf %1, %3 : vector<16x48xf32>
    %99 = arith.maximumf %1, %3 : vector<16x48xf32>
    %100 = arith.minimumf %5, %7 : vector<16x48xf32>
    %101 = arith.maximumf %5, %7 : vector<16x48xf32>
    %102 = arith.minimumf %98, %100 : vector<16x48xf32>
    %103 = arith.maximumf %98, %100 : vector<16x48xf32>
    %104 = arith.minimumf %99, %101 : vector<16x48xf32>
    %105 = arith.maximumf %99, %101 : vector<16x48xf32>
    %106 = arith.minimumf %104, %103 : vector<16x48xf32>
    %107 = arith.maximumf %104, %103 : vector<16x48xf32>
    %108 = arith.minimumf %9, %11 : vector<16x48xf32>
    %109 = arith.maximumf %9, %11 : vector<16x48xf32>
    %110 = arith.minimumf %13, %15 : vector<16x48xf32>
    %111 = arith.maximumf %13, %15 : vector<16x48xf32>
    %112 = arith.minimumf %108, %110 : vector<16x48xf32>
    %113 = arith.maximumf %108, %110 : vector<16x48xf32>
    %114 = arith.minimumf %109, %111 : vector<16x48xf32>
    %115 = arith.maximumf %109, %111 : vector<16x48xf32>
    %116 = arith.minimumf %114, %113 : vector<16x48xf32>
    %117 = arith.maximumf %114, %113 : vector<16x48xf32>
    %118 = arith.minimumf %102, %112 : vector<16x48xf32>
    %119 = arith.maximumf %102, %112 : vector<16x48xf32>
    %120 = arith.minimumf %107, %117 : vector<16x48xf32>
    %121 = arith.maximumf %107, %117 : vector<16x48xf32>
    %122 = arith.minimumf %120, %119 : vector<16x48xf32>
    %123 = arith.maximumf %120, %119 : vector<16x48xf32>
    %124 = arith.minimumf %106, %116 : vector<16x48xf32>
    %125 = arith.maximumf %106, %116 : vector<16x48xf32>
    %126 = arith.minimumf %105, %115 : vector<16x48xf32>
    %127 = arith.maximumf %105, %115 : vector<16x48xf32>
    %128 = arith.minimumf %126, %125 : vector<16x48xf32>
    %129 = arith.maximumf %126, %125 : vector<16x48xf32>
    %130 = arith.minimumf %124, %122 : vector<16x48xf32>
    %131 = arith.maximumf %124, %122 : vector<16x48xf32>
    %132 = arith.minimumf %128, %123 : vector<16x48xf32>
    %133 = arith.maximumf %128, %123 : vector<16x48xf32>
    %134 = arith.minimumf %129, %121 : vector<16x48xf32>
    %135 = arith.maximumf %129, %121 : vector<16x48xf32>
    %136 = arith.minimumf %17, %19 : vector<16x48xf32>
    %137 = arith.maximumf %17, %19 : vector<16x48xf32>
    %138 = arith.minimumf %21, %23 : vector<16x48xf32>
    %139 = arith.maximumf %21, %23 : vector<16x48xf32>
    %140 = arith.minimumf %136, %138 : vector<16x48xf32>
    %141 = arith.maximumf %136, %138 : vector<16x48xf32>
    %142 = arith.minimumf %137, %139 : vector<16x48xf32>
    %143 = arith.maximumf %137, %139 : vector<16x48xf32>
    %144 = arith.minimumf %142, %141 : vector<16x48xf32>
    %145 = arith.maximumf %142, %141 : vector<16x48xf32>
    %146 = arith.minimumf %25, %27 : vector<16x48xf32>
    %147 = arith.maximumf %25, %27 : vector<16x48xf32>
    %148 = arith.minimumf %29, %31 : vector<16x48xf32>
    %149 = arith.maximumf %29, %31 : vector<16x48xf32>
    %150 = arith.minimumf %146, %148 : vector<16x48xf32>
    %151 = arith.maximumf %146, %148 : vector<16x48xf32>
    %152 = arith.minimumf %147, %149 : vector<16x48xf32>
    %153 = arith.maximumf %147, %149 : vector<16x48xf32>
    %154 = arith.minimumf %152, %151 : vector<16x48xf32>
    %155 = arith.maximumf %152, %151 : vector<16x48xf32>
    %156 = arith.minimumf %140, %150 : vector<16x48xf32>
    %157 = arith.maximumf %140, %150 : vector<16x48xf32>
    %158 = arith.minimumf %145, %155 : vector<16x48xf32>
    %159 = arith.maximumf %145, %155 : vector<16x48xf32>
    %160 = arith.minimumf %158, %157 : vector<16x48xf32>
    %161 = arith.maximumf %158, %157 : vector<16x48xf32>
    %162 = arith.minimumf %144, %154 : vector<16x48xf32>
    %163 = arith.maximumf %144, %154 : vector<16x48xf32>
    %164 = arith.minimumf %143, %153 : vector<16x48xf32>
    %165 = arith.maximumf %143, %153 : vector<16x48xf32>
    %166 = arith.minimumf %164, %163 : vector<16x48xf32>
    %167 = arith.maximumf %164, %163 : vector<16x48xf32>
    %168 = arith.minimumf %162, %160 : vector<16x48xf32>
    %169 = arith.maximumf %162, %160 : vector<16x48xf32>
    %170 = arith.minimumf %166, %161 : vector<16x48xf32>
    %171 = arith.maximumf %166, %161 : vector<16x48xf32>
    %172 = arith.minimumf %167, %159 : vector<16x48xf32>
    %173 = arith.maximumf %167, %159 : vector<16x48xf32>
    %174 = arith.minimumf %118, %156 : vector<16x48xf32>
    %175 = arith.maximumf %118, %156 : vector<16x48xf32>
    %176 = arith.minimumf %133, %171 : vector<16x48xf32>
    %177 = arith.maximumf %133, %171 : vector<16x48xf32>
    %178 = arith.minimumf %176, %175 : vector<16x48xf32>
    %179 = arith.maximumf %176, %175 : vector<16x48xf32>
    %180 = arith.minimumf %131, %169 : vector<16x48xf32>
    %181 = arith.maximumf %131, %169 : vector<16x48xf32>
    %182 = arith.minimumf %135, %173 : vector<16x48xf32>
    %183 = arith.maximumf %135, %173 : vector<16x48xf32>
    %184 = arith.minimumf %182, %181 : vector<16x48xf32>
    %185 = arith.maximumf %182, %181 : vector<16x48xf32>
    %186 = arith.minimumf %180, %178 : vector<16x48xf32>
    %187 = arith.maximumf %180, %178 : vector<16x48xf32>
    %188 = arith.minimumf %184, %179 : vector<16x48xf32>
    %189 = arith.maximumf %184, %179 : vector<16x48xf32>
    %190 = arith.minimumf %185, %177 : vector<16x48xf32>
    %191 = arith.maximumf %185, %177 : vector<16x48xf32>
    %192 = arith.minimumf %130, %168 : vector<16x48xf32>
    %193 = arith.maximumf %130, %168 : vector<16x48xf32>
    %194 = arith.minimumf %134, %172 : vector<16x48xf32>
    %195 = arith.maximumf %134, %172 : vector<16x48xf32>
    %196 = arith.minimumf %194, %193 : vector<16x48xf32>
    %197 = arith.maximumf %194, %193 : vector<16x48xf32>
    %198 = arith.minimumf %132, %170 : vector<16x48xf32>
    %199 = arith.maximumf %132, %170 : vector<16x48xf32>
    %200 = arith.minimumf %127, %165 : vector<16x48xf32>
    %201 = arith.maximumf %127, %165 : vector<16x48xf32>
    %202 = arith.minimumf %200, %199 : vector<16x48xf32>
    %203 = arith.maximumf %200, %199 : vector<16x48xf32>
    %204 = arith.minimumf %198, %196 : vector<16x48xf32>
    %205 = arith.maximumf %198, %196 : vector<16x48xf32>
    %206 = arith.minimumf %202, %197 : vector<16x48xf32>
    %207 = arith.maximumf %202, %197 : vector<16x48xf32>
    %208 = arith.minimumf %203, %195 : vector<16x48xf32>
    %209 = arith.maximumf %203, %195 : vector<16x48xf32>
    %210 = arith.minimumf %192, %186 : vector<16x48xf32>
    %211 = arith.maximumf %192, %186 : vector<16x48xf32>
    %212 = arith.minimumf %204, %187 : vector<16x48xf32>
    %213 = arith.maximumf %204, %187 : vector<16x48xf32>
    %214 = arith.minimumf %205, %188 : vector<16x48xf32>
    %215 = arith.maximumf %205, %188 : vector<16x48xf32>
    %216 = arith.minimumf %206, %189 : vector<16x48xf32>
    %217 = arith.maximumf %206, %189 : vector<16x48xf32>
    %218 = arith.minimumf %207, %190 : vector<16x48xf32>
    %219 = arith.maximumf %207, %190 : vector<16x48xf32>
    %220 = arith.minimumf %208, %191 : vector<16x48xf32>
    %221 = arith.maximumf %208, %191 : vector<16x48xf32>
    %222 = arith.minimumf %209, %183 : vector<16x48xf32>
    %223 = arith.maximumf %209, %183 : vector<16x48xf32>
    %224 = arith.minimumf %33, %35 : vector<16x48xf32>
    %225 = arith.maximumf %33, %35 : vector<16x48xf32>
    %226 = arith.minimumf %37, %39 : vector<16x48xf32>
    %227 = arith.maximumf %37, %39 : vector<16x48xf32>
    %228 = arith.minimumf %224, %226 : vector<16x48xf32>
    %229 = arith.maximumf %224, %226 : vector<16x48xf32>
    %230 = arith.minimumf %225, %227 : vector<16x48xf32>
    %231 = arith.maximumf %225, %227 : vector<16x48xf32>
    %232 = arith.minimumf %230, %229 : vector<16x48xf32>
    %233 = arith.maximumf %230, %229 : vector<16x48xf32>
    %234 = arith.minimumf %41, %43 : vector<16x48xf32>
    %235 = arith.maximumf %41, %43 : vector<16x48xf32>
    %236 = arith.minimumf %45, %47 : vector<16x48xf32>
    %237 = arith.maximumf %45, %47 : vector<16x48xf32>
    %238 = arith.minimumf %234, %236 : vector<16x48xf32>
    %239 = arith.maximumf %234, %236 : vector<16x48xf32>
    %240 = arith.minimumf %235, %237 : vector<16x48xf32>
    %241 = arith.maximumf %235, %237 : vector<16x48xf32>
    %242 = arith.minimumf %240, %239 : vector<16x48xf32>
    %243 = arith.maximumf %240, %239 : vector<16x48xf32>
    %244 = arith.minimumf %228, %238 : vector<16x48xf32>
    %245 = arith.maximumf %228, %238 : vector<16x48xf32>
    %246 = arith.minimumf %233, %243 : vector<16x48xf32>
    %247 = arith.maximumf %233, %243 : vector<16x48xf32>
    %248 = arith.minimumf %246, %245 : vector<16x48xf32>
    %249 = arith.maximumf %246, %245 : vector<16x48xf32>
    %250 = arith.minimumf %232, %242 : vector<16x48xf32>
    %251 = arith.maximumf %232, %242 : vector<16x48xf32>
    %252 = arith.minimumf %231, %241 : vector<16x48xf32>
    %253 = arith.maximumf %231, %241 : vector<16x48xf32>
    %254 = arith.minimumf %252, %251 : vector<16x48xf32>
    %255 = arith.maximumf %252, %251 : vector<16x48xf32>
    %256 = arith.minimumf %250, %248 : vector<16x48xf32>
    %257 = arith.maximumf %250, %248 : vector<16x48xf32>
    %258 = arith.minimumf %254, %249 : vector<16x48xf32>
    %259 = arith.maximumf %254, %249 : vector<16x48xf32>
    %260 = arith.minimumf %255, %247 : vector<16x48xf32>
    %261 = arith.maximumf %255, %247 : vector<16x48xf32>
    %262 = arith.minimumf %49, %51 : vector<16x48xf32>
    %263 = arith.maximumf %49, %51 : vector<16x48xf32>
    %264 = arith.minimumf %53, %55 : vector<16x48xf32>
    %265 = arith.maximumf %53, %55 : vector<16x48xf32>
    %266 = arith.minimumf %262, %264 : vector<16x48xf32>
    %267 = arith.maximumf %262, %264 : vector<16x48xf32>
    %268 = arith.minimumf %263, %265 : vector<16x48xf32>
    %269 = arith.maximumf %263, %265 : vector<16x48xf32>
    %270 = arith.minimumf %268, %267 : vector<16x48xf32>
    %271 = arith.maximumf %268, %267 : vector<16x48xf32>
    %272 = arith.minimumf %57, %59 : vector<16x48xf32>
    %273 = arith.maximumf %57, %59 : vector<16x48xf32>
    %274 = arith.minimumf %61, %63 : vector<16x48xf32>
    %275 = arith.maximumf %61, %63 : vector<16x48xf32>
    %276 = arith.minimumf %272, %274 : vector<16x48xf32>
    %277 = arith.maximumf %272, %274 : vector<16x48xf32>
    %278 = arith.minimumf %273, %275 : vector<16x48xf32>
    %279 = arith.maximumf %273, %275 : vector<16x48xf32>
    %280 = arith.minimumf %278, %277 : vector<16x48xf32>
    %281 = arith.maximumf %278, %277 : vector<16x48xf32>
    %282 = arith.minimumf %266, %276 : vector<16x48xf32>
    %283 = arith.maximumf %266, %276 : vector<16x48xf32>
    %284 = arith.minimumf %271, %281 : vector<16x48xf32>
    %285 = arith.maximumf %271, %281 : vector<16x48xf32>
    %286 = arith.minimumf %284, %283 : vector<16x48xf32>
    %287 = arith.maximumf %284, %283 : vector<16x48xf32>
    %288 = arith.minimumf %270, %280 : vector<16x48xf32>
    %289 = arith.maximumf %270, %280 : vector<16x48xf32>
    %290 = arith.minimumf %269, %279 : vector<16x48xf32>
    %291 = arith.maximumf %269, %279 : vector<16x48xf32>
    %292 = arith.minimumf %290, %289 : vector<16x48xf32>
    %293 = arith.maximumf %290, %289 : vector<16x48xf32>
    %294 = arith.minimumf %288, %286 : vector<16x48xf32>
    %295 = arith.maximumf %288, %286 : vector<16x48xf32>
    %296 = arith.minimumf %292, %287 : vector<16x48xf32>
    %297 = arith.maximumf %292, %287 : vector<16x48xf32>
    %298 = arith.minimumf %293, %285 : vector<16x48xf32>
    %299 = arith.maximumf %293, %285 : vector<16x48xf32>
    %300 = arith.minimumf %244, %282 : vector<16x48xf32>
    %301 = arith.maximumf %244, %282 : vector<16x48xf32>
    %302 = arith.minimumf %259, %297 : vector<16x48xf32>
    %303 = arith.maximumf %259, %297 : vector<16x48xf32>
    %304 = arith.minimumf %302, %301 : vector<16x48xf32>
    %305 = arith.maximumf %302, %301 : vector<16x48xf32>
    %306 = arith.minimumf %257, %295 : vector<16x48xf32>
    %307 = arith.maximumf %257, %295 : vector<16x48xf32>
    %308 = arith.minimumf %261, %299 : vector<16x48xf32>
    %309 = arith.maximumf %261, %299 : vector<16x48xf32>
    %310 = arith.minimumf %308, %307 : vector<16x48xf32>
    %311 = arith.maximumf %308, %307 : vector<16x48xf32>
    %312 = arith.minimumf %306, %304 : vector<16x48xf32>
    %313 = arith.maximumf %306, %304 : vector<16x48xf32>
    %314 = arith.minimumf %310, %305 : vector<16x48xf32>
    %315 = arith.maximumf %310, %305 : vector<16x48xf32>
    %316 = arith.minimumf %311, %303 : vector<16x48xf32>
    %317 = arith.maximumf %311, %303 : vector<16x48xf32>
    %318 = arith.minimumf %256, %294 : vector<16x48xf32>
    %319 = arith.maximumf %256, %294 : vector<16x48xf32>
    %320 = arith.minimumf %260, %298 : vector<16x48xf32>
    %321 = arith.maximumf %260, %298 : vector<16x48xf32>
    %322 = arith.minimumf %320, %319 : vector<16x48xf32>
    %323 = arith.maximumf %320, %319 : vector<16x48xf32>
    %324 = arith.minimumf %258, %296 : vector<16x48xf32>
    %325 = arith.maximumf %258, %296 : vector<16x48xf32>
    %326 = arith.minimumf %253, %291 : vector<16x48xf32>
    %327 = arith.maximumf %253, %291 : vector<16x48xf32>
    %328 = arith.minimumf %326, %325 : vector<16x48xf32>
    %329 = arith.maximumf %326, %325 : vector<16x48xf32>
    %330 = arith.minimumf %324, %322 : vector<16x48xf32>
    %331 = arith.maximumf %324, %322 : vector<16x48xf32>
    %332 = arith.minimumf %328, %323 : vector<16x48xf32>
    %333 = arith.maximumf %328, %323 : vector<16x48xf32>
    %334 = arith.minimumf %329, %321 : vector<16x48xf32>
    %335 = arith.maximumf %329, %321 : vector<16x48xf32>
    %336 = arith.minimumf %318, %312 : vector<16x48xf32>
    %337 = arith.maximumf %318, %312 : vector<16x48xf32>
    %338 = arith.minimumf %330, %313 : vector<16x48xf32>
    %339 = arith.maximumf %330, %313 : vector<16x48xf32>
    %340 = arith.minimumf %331, %314 : vector<16x48xf32>
    %341 = arith.maximumf %331, %314 : vector<16x48xf32>
    %342 = arith.minimumf %332, %315 : vector<16x48xf32>
    %343 = arith.maximumf %332, %315 : vector<16x48xf32>
    %344 = arith.minimumf %333, %316 : vector<16x48xf32>
    %345 = arith.maximumf %333, %316 : vector<16x48xf32>
    %346 = arith.minimumf %334, %317 : vector<16x48xf32>
    %347 = arith.maximumf %334, %317 : vector<16x48xf32>
    %348 = arith.minimumf %335, %309 : vector<16x48xf32>
    %349 = arith.maximumf %335, %309 : vector<16x48xf32>
    %350 = arith.minimumf %174, %300 : vector<16x48xf32>
    %351 = arith.maximumf %174, %300 : vector<16x48xf32>
    %352 = arith.minimumf %217, %343 : vector<16x48xf32>
    %353 = arith.maximumf %217, %343 : vector<16x48xf32>
    %354 = arith.minimumf %352, %351 : vector<16x48xf32>
    %355 = arith.maximumf %352, %351 : vector<16x48xf32>
    %356 = arith.minimumf %213, %339 : vector<16x48xf32>
    %357 = arith.maximumf %213, %339 : vector<16x48xf32>
    %358 = arith.minimumf %221, %347 : vector<16x48xf32>
    %359 = arith.maximumf %221, %347 : vector<16x48xf32>
    %360 = arith.minimumf %358, %357 : vector<16x48xf32>
    %361 = arith.maximumf %358, %357 : vector<16x48xf32>
    %362 = arith.minimumf %356, %354 : vector<16x48xf32>
    %363 = arith.maximumf %356, %354 : vector<16x48xf32>
    %364 = arith.minimumf %360, %355 : vector<16x48xf32>
    %365 = arith.maximumf %360, %355 : vector<16x48xf32>
    %366 = arith.minimumf %361, %353 : vector<16x48xf32>
    %367 = arith.maximumf %361, %353 : vector<16x48xf32>
    %368 = arith.minimumf %211, %337 : vector<16x48xf32>
    %369 = arith.maximumf %211, %337 : vector<16x48xf32>
    %370 = arith.minimumf %219, %345 : vector<16x48xf32>
    %371 = arith.maximumf %219, %345 : vector<16x48xf32>
    %372 = arith.minimumf %370, %369 : vector<16x48xf32>
    %373 = arith.maximumf %370, %369 : vector<16x48xf32>
    %374 = arith.minimumf %215, %341 : vector<16x48xf32>
    %375 = arith.maximumf %215, %341 : vector<16x48xf32>
    %376 = arith.minimumf %223, %349 : vector<16x48xf32>
    %377 = arith.minimumf %376, %375 : vector<16x48xf32>
    %378 = arith.maximumf %376, %375 : vector<16x48xf32>
    %379 = arith.minimumf %374, %372 : vector<16x48xf32>
    %380 = arith.maximumf %374, %372 : vector<16x48xf32>
    %381 = arith.minimumf %377, %373 : vector<16x48xf32>
    %382 = arith.maximumf %377, %373 : vector<16x48xf32>
    %383 = arith.minimumf %378, %371 : vector<16x48xf32>
    %384 = arith.maximumf %378, %371 : vector<16x48xf32>
    %385 = arith.minimumf %368, %362 : vector<16x48xf32>
    %386 = arith.maximumf %368, %362 : vector<16x48xf32>
    %387 = arith.minimumf %379, %363 : vector<16x48xf32>
    %388 = arith.maximumf %379, %363 : vector<16x48xf32>
    %389 = arith.minimumf %380, %364 : vector<16x48xf32>
    %390 = arith.maximumf %380, %364 : vector<16x48xf32>
    %391 = arith.minimumf %381, %365 : vector<16x48xf32>
    %392 = arith.maximumf %381, %365 : vector<16x48xf32>
    %393 = arith.minimumf %382, %366 : vector<16x48xf32>
    %394 = arith.maximumf %382, %366 : vector<16x48xf32>
    %395 = arith.minimumf %383, %367 : vector<16x48xf32>
    %396 = arith.maximumf %383, %367 : vector<16x48xf32>
    %397 = arith.minimumf %384, %359 : vector<16x48xf32>
    %398 = arith.maximumf %384, %359 : vector<16x48xf32>
    %399 = arith.minimumf %210, %336 : vector<16x48xf32>
    %400 = arith.maximumf %210, %336 : vector<16x48xf32>
    %401 = arith.minimumf %218, %344 : vector<16x48xf32>
    %402 = arith.maximumf %218, %344 : vector<16x48xf32>
    %403 = arith.minimumf %401, %400 : vector<16x48xf32>
    %404 = arith.maximumf %401, %400 : vector<16x48xf32>
    %405 = arith.minimumf %214, %340 : vector<16x48xf32>
    %406 = arith.maximumf %214, %340 : vector<16x48xf32>
    %407 = arith.minimumf %222, %348 : vector<16x48xf32>
    %408 = arith.maximumf %222, %348 : vector<16x48xf32>
    %409 = arith.minimumf %407, %406 : vector<16x48xf32>
    %410 = arith.maximumf %407, %406 : vector<16x48xf32>
    %411 = arith.minimumf %405, %403 : vector<16x48xf32>
    %412 = arith.maximumf %405, %403 : vector<16x48xf32>
    %413 = arith.minimumf %409, %404 : vector<16x48xf32>
    %414 = arith.maximumf %409, %404 : vector<16x48xf32>
    %415 = arith.minimumf %410, %402 : vector<16x48xf32>
    %416 = arith.maximumf %410, %402 : vector<16x48xf32>
    %417 = arith.minimumf %212, %338 : vector<16x48xf32>
    %418 = arith.maximumf %212, %338 : vector<16x48xf32>
    %419 = arith.minimumf %220, %346 : vector<16x48xf32>
    %420 = arith.maximumf %220, %346 : vector<16x48xf32>
    %421 = arith.minimumf %419, %418 : vector<16x48xf32>
    %422 = arith.maximumf %419, %418 : vector<16x48xf32>
    %423 = arith.minimumf %216, %342 : vector<16x48xf32>
    %424 = arith.maximumf %216, %342 : vector<16x48xf32>
    %425 = arith.minimumf %201, %327 : vector<16x48xf32>
    %426 = arith.minimumf %425, %424 : vector<16x48xf32>
    %427 = arith.maximumf %425, %424 : vector<16x48xf32>
    %428 = arith.minimumf %423, %421 : vector<16x48xf32>
    %429 = arith.maximumf %423, %421 : vector<16x48xf32>
    %430 = arith.minimumf %426, %422 : vector<16x48xf32>
    %431 = arith.maximumf %426, %422 : vector<16x48xf32>
    %432 = arith.minimumf %427, %420 : vector<16x48xf32>
    %433 = arith.maximumf %427, %420 : vector<16x48xf32>
    %434 = arith.minimumf %417, %411 : vector<16x48xf32>
    %435 = arith.maximumf %417, %411 : vector<16x48xf32>
    %436 = arith.minimumf %428, %412 : vector<16x48xf32>
    %437 = arith.maximumf %428, %412 : vector<16x48xf32>
    %438 = arith.minimumf %429, %413 : vector<16x48xf32>
    %439 = arith.maximumf %429, %413 : vector<16x48xf32>
    %440 = arith.minimumf %430, %414 : vector<16x48xf32>
    %441 = arith.maximumf %430, %414 : vector<16x48xf32>
    %442 = arith.minimumf %431, %415 : vector<16x48xf32>
    %443 = arith.maximumf %431, %415 : vector<16x48xf32>
    %444 = arith.minimumf %432, %416 : vector<16x48xf32>
    %445 = arith.maximumf %432, %416 : vector<16x48xf32>
    %446 = arith.minimumf %433, %408 : vector<16x48xf32>
    %447 = arith.minimumf %399, %385 : vector<16x48xf32>
    %448 = arith.maximumf %399, %385 : vector<16x48xf32>
    %449 = arith.minimumf %434, %386 : vector<16x48xf32>
    %450 = arith.maximumf %434, %386 : vector<16x48xf32>
    %451 = arith.minimumf %435, %387 : vector<16x48xf32>
    %452 = arith.maximumf %435, %387 : vector<16x48xf32>
    %453 = arith.minimumf %436, %388 : vector<16x48xf32>
    %454 = arith.maximumf %436, %388 : vector<16x48xf32>
    %455 = arith.minimumf %437, %389 : vector<16x48xf32>
    %456 = arith.maximumf %437, %389 : vector<16x48xf32>
    %457 = arith.minimumf %438, %390 : vector<16x48xf32>
    %458 = arith.maximumf %438, %390 : vector<16x48xf32>
    %459 = arith.minimumf %439, %391 : vector<16x48xf32>
    %460 = arith.maximumf %439, %391 : vector<16x48xf32>
    %461 = arith.minimumf %440, %392 : vector<16x48xf32>
    %462 = arith.maximumf %440, %392 : vector<16x48xf32>
    %463 = arith.minimumf %441, %393 : vector<16x48xf32>
    %464 = arith.maximumf %441, %393 : vector<16x48xf32>
    %465 = arith.minimumf %442, %394 : vector<16x48xf32>
    %466 = arith.maximumf %442, %394 : vector<16x48xf32>
    %467 = arith.minimumf %443, %395 : vector<16x48xf32>
    %468 = arith.maximumf %443, %395 : vector<16x48xf32>
    %469 = arith.minimumf %444, %396 : vector<16x48xf32>
    %470 = arith.maximumf %444, %396 : vector<16x48xf32>
    %471 = arith.minimumf %445, %397 : vector<16x48xf32>
    %472 = arith.maximumf %445, %397 : vector<16x48xf32>
    %473 = arith.minimumf %446, %398 : vector<16x48xf32>
    %474 = arith.minimumf %65, %67 : vector<16x48xf32>
    %475 = arith.maximumf %65, %67 : vector<16x48xf32>
    %476 = arith.minimumf %69, %71 : vector<16x48xf32>
    %477 = arith.maximumf %69, %71 : vector<16x48xf32>
    %478 = arith.minimumf %474, %476 : vector<16x48xf32>
    %479 = arith.maximumf %474, %476 : vector<16x48xf32>
    %480 = arith.minimumf %475, %477 : vector<16x48xf32>
    %481 = arith.maximumf %475, %477 : vector<16x48xf32>
    %482 = arith.minimumf %480, %479 : vector<16x48xf32>
    %483 = arith.maximumf %480, %479 : vector<16x48xf32>
    %484 = arith.minimumf %73, %75 : vector<16x48xf32>
    %485 = arith.maximumf %73, %75 : vector<16x48xf32>
    %486 = arith.minimumf %77, %79 : vector<16x48xf32>
    %487 = arith.maximumf %77, %79 : vector<16x48xf32>
    %488 = arith.minimumf %484, %486 : vector<16x48xf32>
    %489 = arith.maximumf %484, %486 : vector<16x48xf32>
    %490 = arith.minimumf %485, %487 : vector<16x48xf32>
    %491 = arith.maximumf %485, %487 : vector<16x48xf32>
    %492 = arith.minimumf %490, %489 : vector<16x48xf32>
    %493 = arith.maximumf %490, %489 : vector<16x48xf32>
    %494 = arith.minimumf %478, %488 : vector<16x48xf32>
    %495 = arith.maximumf %478, %488 : vector<16x48xf32>
    %496 = arith.minimumf %483, %493 : vector<16x48xf32>
    %497 = arith.maximumf %483, %493 : vector<16x48xf32>
    %498 = arith.minimumf %496, %495 : vector<16x48xf32>
    %499 = arith.maximumf %496, %495 : vector<16x48xf32>
    %500 = arith.minimumf %482, %492 : vector<16x48xf32>
    %501 = arith.maximumf %482, %492 : vector<16x48xf32>
    %502 = arith.minimumf %481, %491 : vector<16x48xf32>
    %503 = arith.maximumf %481, %491 : vector<16x48xf32>
    %504 = arith.minimumf %502, %501 : vector<16x48xf32>
    %505 = arith.maximumf %502, %501 : vector<16x48xf32>
    %506 = arith.minimumf %500, %498 : vector<16x48xf32>
    %507 = arith.maximumf %500, %498 : vector<16x48xf32>
    %508 = arith.minimumf %504, %499 : vector<16x48xf32>
    %509 = arith.maximumf %504, %499 : vector<16x48xf32>
    %510 = arith.minimumf %505, %497 : vector<16x48xf32>
    %511 = arith.maximumf %505, %497 : vector<16x48xf32>
    %512 = arith.minimumf %81, %83 : vector<16x48xf32>
    %513 = arith.maximumf %81, %83 : vector<16x48xf32>
    %514 = arith.minimumf %85, %87 : vector<16x48xf32>
    %515 = arith.maximumf %85, %87 : vector<16x48xf32>
    %516 = arith.minimumf %512, %514 : vector<16x48xf32>
    %517 = arith.maximumf %512, %514 : vector<16x48xf32>
    %518 = arith.minimumf %513, %515 : vector<16x48xf32>
    %519 = arith.maximumf %513, %515 : vector<16x48xf32>
    %520 = arith.minimumf %518, %517 : vector<16x48xf32>
    %521 = arith.maximumf %518, %517 : vector<16x48xf32>
    %522 = arith.minimumf %89, %91 : vector<16x48xf32>
    %523 = arith.maximumf %89, %91 : vector<16x48xf32>
    %524 = arith.minimumf %93, %95 : vector<16x48xf32>
    %525 = arith.maximumf %93, %95 : vector<16x48xf32>
    %526 = arith.minimumf %522, %524 : vector<16x48xf32>
    %527 = arith.maximumf %522, %524 : vector<16x48xf32>
    %528 = arith.minimumf %523, %525 : vector<16x48xf32>
    %529 = arith.maximumf %523, %525 : vector<16x48xf32>
    %530 = arith.minimumf %528, %527 : vector<16x48xf32>
    %531 = arith.maximumf %528, %527 : vector<16x48xf32>
    %532 = arith.minimumf %516, %526 : vector<16x48xf32>
    %533 = arith.maximumf %516, %526 : vector<16x48xf32>
    %534 = arith.minimumf %521, %531 : vector<16x48xf32>
    %535 = arith.maximumf %521, %531 : vector<16x48xf32>
    %536 = arith.minimumf %534, %533 : vector<16x48xf32>
    %537 = arith.maximumf %534, %533 : vector<16x48xf32>
    %538 = arith.minimumf %520, %530 : vector<16x48xf32>
    %539 = arith.maximumf %520, %530 : vector<16x48xf32>
    %540 = arith.minimumf %519, %529 : vector<16x48xf32>
    %541 = arith.maximumf %519, %529 : vector<16x48xf32>
    %542 = arith.minimumf %540, %539 : vector<16x48xf32>
    %543 = arith.maximumf %540, %539 : vector<16x48xf32>
    %544 = arith.minimumf %538, %536 : vector<16x48xf32>
    %545 = arith.maximumf %538, %536 : vector<16x48xf32>
    %546 = arith.minimumf %542, %537 : vector<16x48xf32>
    %547 = arith.maximumf %542, %537 : vector<16x48xf32>
    %548 = arith.minimumf %543, %535 : vector<16x48xf32>
    %549 = arith.maximumf %543, %535 : vector<16x48xf32>
    %550 = arith.minimumf %494, %532 : vector<16x48xf32>
    %551 = arith.maximumf %494, %532 : vector<16x48xf32>
    %552 = arith.minimumf %509, %547 : vector<16x48xf32>
    %553 = arith.maximumf %509, %547 : vector<16x48xf32>
    %554 = arith.minimumf %552, %551 : vector<16x48xf32>
    %555 = arith.maximumf %552, %551 : vector<16x48xf32>
    %556 = arith.minimumf %507, %545 : vector<16x48xf32>
    %557 = arith.maximumf %507, %545 : vector<16x48xf32>
    %558 = arith.minimumf %511, %549 : vector<16x48xf32>
    %559 = arith.maximumf %511, %549 : vector<16x48xf32>
    %560 = arith.minimumf %558, %557 : vector<16x48xf32>
    %561 = arith.maximumf %558, %557 : vector<16x48xf32>
    %562 = arith.minimumf %556, %554 : vector<16x48xf32>
    %563 = arith.maximumf %556, %554 : vector<16x48xf32>
    %564 = arith.minimumf %560, %555 : vector<16x48xf32>
    %565 = arith.maximumf %560, %555 : vector<16x48xf32>
    %566 = arith.minimumf %561, %553 : vector<16x48xf32>
    %567 = arith.maximumf %561, %553 : vector<16x48xf32>
    %568 = arith.minimumf %506, %544 : vector<16x48xf32>
    %569 = arith.maximumf %506, %544 : vector<16x48xf32>
    %570 = arith.minimumf %510, %548 : vector<16x48xf32>
    %571 = arith.maximumf %510, %548 : vector<16x48xf32>
    %572 = arith.minimumf %570, %569 : vector<16x48xf32>
    %573 = arith.maximumf %570, %569 : vector<16x48xf32>
    %574 = arith.minimumf %508, %546 : vector<16x48xf32>
    %575 = arith.maximumf %508, %546 : vector<16x48xf32>
    %576 = arith.minimumf %503, %541 : vector<16x48xf32>
    %577 = arith.maximumf %503, %541 : vector<16x48xf32>
    %578 = arith.minimumf %576, %575 : vector<16x48xf32>
    %579 = arith.maximumf %576, %575 : vector<16x48xf32>
    %580 = arith.minimumf %574, %572 : vector<16x48xf32>
    %581 = arith.maximumf %574, %572 : vector<16x48xf32>
    %582 = arith.minimumf %578, %573 : vector<16x48xf32>
    %583 = arith.maximumf %578, %573 : vector<16x48xf32>
    %584 = arith.minimumf %579, %571 : vector<16x48xf32>
    %585 = arith.maximumf %579, %571 : vector<16x48xf32>
    %586 = arith.minimumf %568, %562 : vector<16x48xf32>
    %587 = arith.maximumf %568, %562 : vector<16x48xf32>
    %588 = arith.minimumf %580, %563 : vector<16x48xf32>
    %589 = arith.maximumf %580, %563 : vector<16x48xf32>
    %590 = arith.minimumf %581, %564 : vector<16x48xf32>
    %591 = arith.maximumf %581, %564 : vector<16x48xf32>
    %592 = arith.minimumf %582, %565 : vector<16x48xf32>
    %593 = arith.maximumf %582, %565 : vector<16x48xf32>
    %594 = arith.minimumf %583, %566 : vector<16x48xf32>
    %595 = arith.maximumf %583, %566 : vector<16x48xf32>
    %596 = arith.minimumf %584, %567 : vector<16x48xf32>
    %597 = arith.maximumf %584, %567 : vector<16x48xf32>
    %598 = arith.minimumf %585, %559 : vector<16x48xf32>
    %599 = arith.maximumf %585, %559 : vector<16x48xf32>
    %600 = arith.minimumf %550, %97 : vector<16x48xf32>
    %601 = arith.maximumf %550, %97 : vector<16x48xf32>
    %602 = arith.minimumf %593, %601 : vector<16x48xf32>
    %603 = arith.maximumf %593, %601 : vector<16x48xf32>
    %604 = arith.minimumf %589, %602 : vector<16x48xf32>
    %605 = arith.maximumf %589, %602 : vector<16x48xf32>
    %606 = arith.minimumf %597, %603 : vector<16x48xf32>
    %607 = arith.maximumf %597, %603 : vector<16x48xf32>
    %608 = arith.minimumf %591, %595 : vector<16x48xf32>
    %609 = arith.maximumf %591, %595 : vector<16x48xf32>
    %610 = arith.minimumf %587, %604 : vector<16x48xf32>
    %611 = arith.maximumf %587, %604 : vector<16x48xf32>
    %612 = arith.minimumf %608, %605 : vector<16x48xf32>
    %613 = arith.maximumf %608, %605 : vector<16x48xf32>
    %614 = arith.minimumf %609, %606 : vector<16x48xf32>
    %615 = arith.maximumf %609, %606 : vector<16x48xf32>
    %616 = arith.minimumf %599, %607 : vector<16x48xf32>
    %617 = arith.maximumf %599, %607 : vector<16x48xf32>
    %618 = arith.minimumf %590, %594 : vector<16x48xf32>
    %619 = arith.maximumf %590, %594 : vector<16x48xf32>
    %620 = arith.minimumf %592, %596 : vector<16x48xf32>
    %621 = arith.maximumf %592, %596 : vector<16x48xf32>
    %622 = arith.minimumf %588, %618 : vector<16x48xf32>
    %623 = arith.maximumf %588, %618 : vector<16x48xf32>
    %624 = arith.minimumf %620, %619 : vector<16x48xf32>
    %625 = arith.maximumf %620, %619 : vector<16x48xf32>
    %626 = arith.minimumf %621, %598 : vector<16x48xf32>
    %627 = arith.maximumf %621, %598 : vector<16x48xf32>
    %628 = arith.minimumf %586, %610 : vector<16x48xf32>
    %629 = arith.maximumf %586, %610 : vector<16x48xf32>
    %630 = arith.minimumf %622, %611 : vector<16x48xf32>
    %631 = arith.maximumf %622, %611 : vector<16x48xf32>
    %632 = arith.minimumf %623, %612 : vector<16x48xf32>
    %633 = arith.maximumf %623, %612 : vector<16x48xf32>
    %634 = arith.minimumf %624, %613 : vector<16x48xf32>
    %635 = arith.maximumf %624, %613 : vector<16x48xf32>
    %636 = arith.minimumf %625, %614 : vector<16x48xf32>
    %637 = arith.maximumf %625, %614 : vector<16x48xf32>
    %638 = arith.minimumf %626, %615 : vector<16x48xf32>
    %639 = arith.maximumf %626, %615 : vector<16x48xf32>
    %640 = arith.minimumf %627, %616 : vector<16x48xf32>
    %641 = arith.maximumf %627, %616 : vector<16x48xf32>
    %642 = arith.minimumf %577, %617 : vector<16x48xf32>
    %643 = arith.maximumf %577, %617 : vector<16x48xf32>
    %644 = arith.maximumf %350, %600 : vector<16x48xf32>
    %645 = arith.minimumf %462, %643 : vector<16x48xf32>
    %646 = arith.maximumf %645, %644 : vector<16x48xf32>
    %647 = arith.maximumf %454, %635 : vector<16x48xf32>
    %648 = arith.minimumf %470, %647 : vector<16x48xf32>
    %649 = arith.minimumf %648, %646 : vector<16x48xf32>
    %650 = arith.maximumf %450, %631 : vector<16x48xf32>
    %651 = arith.minimumf %466, %650 : vector<16x48xf32>
    %652 = arith.minimumf %458, %639 : vector<16x48xf32>
    %653 = arith.maximumf %652, %651 : vector<16x48xf32>
    %654 = arith.maximumf %653, %649 : vector<16x48xf32>
    %655 = arith.maximumf %448, %629 : vector<16x48xf32>
    %656 = arith.maximumf %464, %655 : vector<16x48xf32>
    %657 = arith.maximumf %456, %637 : vector<16x48xf32>
    %658 = arith.minimumf %472, %657 : vector<16x48xf32>
    %659 = arith.minimumf %658, %656 : vector<16x48xf32>
    %660 = arith.maximumf %452, %633 : vector<16x48xf32>
    %661 = arith.minimumf %468, %660 : vector<16x48xf32>
    %662 = arith.minimumf %460, %641 : vector<16x48xf32>
    %663 = arith.maximumf %662, %661 : vector<16x48xf32>
    %664 = arith.minimumf %663, %659 : vector<16x48xf32>
    %665 = arith.maximumf %664, %654 : vector<16x48xf32>
    %666 = arith.maximumf %447, %628 : vector<16x48xf32>
    %667 = arith.maximumf %463, %666 : vector<16x48xf32>
    %668 = arith.maximumf %455, %636 : vector<16x48xf32>
    %669 = arith.minimumf %471, %668 : vector<16x48xf32>
    %670 = arith.minimumf %669, %667 : vector<16x48xf32>
    %671 = arith.maximumf %451, %632 : vector<16x48xf32>
    %672 = arith.minimumf %467, %671 : vector<16x48xf32>
    %673 = arith.minimumf %459, %640 : vector<16x48xf32>
    %674 = arith.maximumf %673, %672 : vector<16x48xf32>
    %675 = arith.maximumf %674, %670 : vector<16x48xf32>
    %676 = arith.maximumf %449, %630 : vector<16x48xf32>
    %677 = arith.maximumf %465, %676 : vector<16x48xf32>
    %678 = arith.maximumf %457, %638 : vector<16x48xf32>
    %679 = arith.minimumf %473, %678 : vector<16x48xf32>
    %680 = arith.minimumf %679, %677 : vector<16x48xf32>
    %681 = arith.maximumf %453, %634 : vector<16x48xf32>
    %682 = arith.minimumf %469, %681 : vector<16x48xf32>
    %683 = arith.minimumf %461, %642 : vector<16x48xf32>
    %684 = arith.maximumf %683, %682 : vector<16x48xf32>
    %685 = arith.minimumf %684, %680 : vector<16x48xf32>
    %686 = arith.minimumf %685, %675 : vector<16x48xf32>
    %687 = arith.maximumf %686, %665 : vector<16x48xf32>
    %c0_140 = arith.constant 0 : index
    %c0_141 = arith.constant 0 : index
    %688 = vector.load %arg2[%c0_140, %c0_141] : memref<16x48xf32, #tpu.memory_space<vmem>>, vector<16x48xf32>
    tpu.vector_store %arg2[%c0_140, %c0_141], %687 {strides = array<i32>} : memref<16x48xf32, #tpu.memory_space<vmem>>, vector<16x48xf32>,
    return
  }
  func.func @transform_0(%arg0: i32) -> (i32, i32, i32) {
    %c0_i32 = arith.constant 0 : i32
    %c0_i32_0 = arith.constant 0 : i32
    %c0_i32_1 = arith.constant 0 : i32
    %c0_i32_2 = arith.constant 0 : i32
    return %c0_i32, %c0_i32_0, %c0_i32_1 : i32, i32, i32
  }
  func.func @transform_1(%arg0: i32) -> (i32, i32) {
    %c0_i32 = arith.constant 0 : i32
    %c0_i32_0 = arith.constant 0 : i32
    %c0_i32_1 = arith.constant 0 : i32
    return %c0_i32, %c0_i32_0 : i32, i32
  }
}

</mosaic_0001>

<llo_original>
// kernel: tpu_custom_call.1
$region0: #{tpu_custom_call.1}
  #allocation0 [shape = 'u32[]', space=smem, size = 0x4, offset = 0x4, fixed_abs, tag = 'smem constant byte address 0x4 - core index']
  #allocation1 [shape = 'u32[72,128]{1,0:T(1,128)}', space=vmem, size = 0x9000, scoped, tag = 'internal scratch']
  %s0 = inlined_call_operand.hbm [shape: f32[7,22,48], index: 0, kind: input, shape index: {}]
  %s1 = inlined_call_operand.hbm [shape: f32[16,48], index: 1, kind: output, shape index: {}]
  %s2 = sld [smem:[#allocation0]]
  $region18: #{tpu_custom_call.1} parent=0
    _
  %s4 = ssub.s32 1, %s2
  %s5 = scalar_select 0, %s4, %s2
  $region1: #{tpu_custom_call.1} parent=0
    #allocation2 [shape = 'u8[86016]{0}', space=vmem, size = 0x15000, scoped, tag = 'input window, operand 0, single buffered']
    #allocation3 [shape = 's32[1]{0}', space=sflag, size = 0x4, scoped, tag = 'scoped memory for tpu_custom_call.1']
    #allocation4 [shape = 's32[1]{0}', space=sflag, size = 0x4, scoped, tag = 'scoped memory for tpu_custom_call.1']
    #allocation5 [shape = 'u8[8192]{0}', space=vmem, size = 0x2000, scoped, tag = 'output window, operand 0, single buffered']
    %6 = vsyncpa [#allocation3], 0
    %7 = vsyncpa [#allocation4], 0
    // Predicated region
    $region2: #{tpu_custom_call.1} parent=1 // pred_check
      _
    $region3: #{tpu_custom_call.1} parent=1 // pred_check_branch
      %9 = sbr.rel (0) target = $region5
    $region4: #{tpu_custom_call.1} parent=1 // pred_region
      %11 = vsyncadd [#allocation3], 0
      %s12 = sshll.u32 %s0, 4
      %s13 = int_to_ptr.hbm [resolvable:$true] %s12
      %s14 = sshll.u32 [#allocation2], 4
      %s15 = int_to_ptr.vmem [resolvable:$true] %s14
      %20 = dma.hbm_to_vmem [thread:$0]  %s13, 2688, %s15, [#allocation3], 128, 128, 8
    $region5: #{tpu_custom_call.1} parent=1 // pred_fallthru
      _
    // Predicated region
    $region6: #{tpu_custom_call.1} parent=1 // pred_check
      _
    $region7: #{tpu_custom_call.1} parent=1 // pred_check_branch
      %22 = sbr.rel (0) target = $region9
    $region8: #{tpu_custom_call.1} parent=1 // pred_region
      %24 = dma.done [#allocation3], 2688
    $region9: #{tpu_custom_call.1} parent=1 // pred_fallthru
      _
    %v25 = vld [vmem:[#allocation2] sm:$0xff]
    %v26 = vld [vmem:[#allocation2 + $0x8] sm:$0xff]
    %s27 = scalar_lea.vmem [#allocation2], 24
    %v28 = vld [vmem:[%s27] sm:$0xff]
    %v29 = vld [vmem:[%s27 + $0x8] sm:$0xff]
    %s30 = scalar_lea.vmem [#allocation2], 48
    %v31 = vld [vmem:[%s30] sm:$0xff]
    %v32 = vld [vmem:[%s30 + $0x8] sm:$0xff]
    %s33 = scalar_lea.vmem [#allocation2], 72
    %v34 = vld [vmem:[%s33] sm:$0xff]
    %v35 = vld [vmem:[%s33 + $0x8] sm:$0xff]
    %s36 = scalar_lea.vmem [#allocation2], 96
    %v37 = vld [vmem:[%s36] sm:$0xff]
    %v38 = vld [vmem:[%s36 + $0x8] sm:$0xff]
    %s39 = scalar_lea.vmem [#allocation2], 120
    %v40 = vld [vmem:[%s39] sm:$0xff]
    %v41 = vld [vmem:[%s39 + $0x8] sm:$0xff]
    %s42 = scalar_lea.vmem [#allocation2], 144
    %v43 = vld [vmem:[%s42] sm:$0xff]
    %v44 = vld [vmem:[%s42 + $0x8] sm:$0xff]
    %v45 = vld [vmem:[#allocation2 + $0x1] sm:$0xff]
    %v46 = vld [vmem:[#allocation2 + $0x9] sm:$0xff]
    %v47 = vld [vmem:[%s27 + $0x1] sm:$0xff]
    %v48 = vld [vmem:[%s27 + $0x9] sm:$0xff]
    %v49 = vld [vmem:[%s30 + $0x1] sm:$0xff]
    %v50 = vld [vmem:[%s30 + $0x9] sm:$0xff]
    %v51 = vld [vmem:[%s33 + $0x1] sm:$0xff]
    %v52 = vld [vmem:[%s33 + $0x9] sm:$0xff]
    %v53 = vld [vmem:[%s36 + $0x1] sm:$0xff]
    %v54 = vld [vmem:[%s36 + $0x9] sm:$0xff]
    %v55 = vld [vmem:[%s39 + $0x1] sm:$0xff]
    %v56 = vld [vmem:[%s39 + $0x9] sm:$0xff]
    %v57 = vld [vmem:[%s42 + $0x1] sm:$0xff]
    %v58 = vld [vmem:[%s42 + $0x9] sm:$0xff]
    %v59 = vld [vmem:[#allocation2 + $0x2] sm:$0xff]
    %v60 = vld [vmem:[#allocation2 + $0xa] sm:$0xff]
    %v61 = vld [vmem:[%s27 + $0x2] sm:$0xff]
    %v62 = vld [vmem:[%s27 + $0xa] sm:$0xff]
    %v63 = vld [vmem:[%s30 + $0x2] sm:$0xff]
    %v64 = vld [vmem:[%s30 + $0xa] sm:$0xff]
    %v65 = vld [vmem:[%s33 + $0x2] sm:$0xff]
    %v66 = vld [vmem:[%s33 + $0xa] sm:$0xff]
    %v67 = vld [vmem:[%s36 + $0x2] sm:$0xff]
    %v68 = vld [vmem:[%s36 + $0xa] sm:$0xff]
    %v69 = vld [vmem:[%s39 + $0x2] sm:$0xff]
    %v70 = vld [vmem:[%s39 + $0xa] sm:$0xff]
    %v71 = vld [vmem:[%s42 + $0x2] sm:$0xff]
    %v72 = vld [vmem:[%s42 + $0xa] sm:$0xff]
    %v73 = vld [vmem:[#allocation2 + $0x3] sm:$0xff]
    %v74 = vld [vmem:[#allocation2 + $0xb] sm:$0xff]
    %v75 = vld [vmem:[%s27 + $0x3] sm:$0xff]
    %v76 = vld [vmem:[%s27 + $0xb] sm:$0xff]
    %v77 = vld [vmem:[%s30 + $0x3] sm:$0xff]
    %v78 = vld [vmem:[%s30 + $0xb] sm:$0xff]
    %v79 = vld [vmem:[%s33 + $0x3] sm:$0xff]
    %v80 = vld [vmem:[%s33 + $0xb] sm:$0xff]
    %v81 = vld [vmem:[%s36 + $0x3] sm:$0xff]
    %v82 = vld [vmem:[%s36 + $0xb] sm:$0xff]
    %v83 = vld [vmem:[%s39 + $0x3] sm:$0xff]
    %v84 = vld [vmem:[%s39 + $0xb] sm:$0xff]
    %v85 = vld [vmem:[%s42 + $0x3] sm:$0xff]
    %v86 = vld [vmem:[%s42 + $0xb] sm:$0xff]
    %v87 = vld [vmem:[#allocation2 + $0x4] sm:$0xff]
    %v88 = vld [vmem:[#allocation2 + $0xc] sm:$0xff]
    %v89 = vld [vmem:[%s27 + $0x4] sm:$0xff]
    %v90 = vld [vmem:[%s27 + $0xc] sm:$0xff]
    %v91 = vld [vmem:[%s30 + $0x4] sm:$0xff]
    %v92 = vld [vmem:[%s30 + $0xc] sm:$0xff]
    %v93 = vld [vmem:[%s33 + $0x4] sm:$0xff]
    %v94 = vld [vmem:[%s33 + $0xc] sm:$0xff]
    %v95 = vld [vmem:[%s36 + $0x4] sm:$0xff]
    %v96 = vld [vmem:[%s36 + $0xc] sm:$0xff]
    %v97 = vld [vmem:[%s39 + $0x4] sm:$0xff]
    %v98 = vld [vmem:[%s39 + $0xc] sm:$0xff]
    %v99 = vld [vmem:[%s42 + $0x4] sm:$0xff]
    %v100 = vld [vmem:[%s42 + $0xc] sm:$0xff]
    %v101 = vld [vmem:[#allocation2 + $0x5] sm:$0xff]
    %v102 = vld [vmem:[#allocation2 + $0xd] sm:$0xff]
    %v103 = vld [vmem:[%s27 + $0x5] sm:$0xff]
    %v104 = vld [vmem:[%s27 + $0xd] sm:$0xff]
    %v105 = vld [vmem:[%s30 + $0x5] sm:$0xff]
    %v106 = vld [vmem:[%s30 + $0xd] sm:$0xff]
    %v107 = vld [vmem:[%s33 + $0x5] sm:$0xff]
    %v108 = vld [vmem:[%s33 + $0xd] sm:$0xff]
    %v109 = vld [vmem:[%s36 + $0x5] sm:$0xff]
    %v110 = vld [vmem:[%s36 + $0xd] sm:$0xff]
    %v111 = vld [vmem:[%s39 + $0x5] sm:$0xff]
    %v112 = vld [vmem:[%s39 + $0xd] sm:$0xff]
    %v113 = vld [vmem:[%s42 + $0x5] sm:$0xff]
    %v114 = vld [vmem:[%s42 + $0xd] sm:$0xff]
    %v115 = vld [vmem:[#allocation2 + $0x6] sm:$0xff]
    %v116 = vld [vmem:[#allocation2 + $0xe] sm:$0xff]
    %v117 = vld [vmem:[%s27 + $0x6] sm:$0xff]
    %v118 = vld [vmem:[%s27 + $0xe] sm:$0xff]
    %v119 = vld [vmem:[%s30 + $0x6] sm:$0xff]
    %v120 = vld [vmem:[%s30 + $0xe] sm:$0xff]
    %v121 = vld [vmem:[%s33 + $0x6] sm:$0xff]
    %v122 = vld [vmem:[%s33 + $0xe] sm:$0xff]
    %v123 = vld [vmem:[%s36 + $0x6] sm:$0xff]
    %v124 = vld [vmem:[%s36 + $0xe] sm:$0xff]
    %v125 = vld [vmem:[%s39 + $0x6] sm:$0xff]
    %v126 = vld [vmem:[%s39 + $0xe] sm:$0xff]
    %v127 = vld [vmem:[%s42 + $0x6] sm:$0xff]
    %v128 = vld [vmem:[%s42 + $0xe] sm:$0xff]
    %v129 = vmin.f32 %v25, %v28
    %v130 = vmin.f32 %v26, %v29
    %v131 = vmax.f32 %v25, %v28
    %v132 = vmax.f32 %v26, %v29
    %v133 = vmin.f32 %v31, %v34
    %v134 = vmin.f32 %v32, %v35
    %v135 = vmax.f32 %v31, %v34
    %v136 = vmax.f32 %v32, %v35
    %v137 = vmin.f32 %v129, %v133
    %v138 = vmin.f32 %v130, %v134
    %v139 = vmax.f32 %v129, %v133
    %v140 = vmax.f32 %v130, %v134
    %v141 = vmin.f32 %v131, %v135
    %v142 = vmin.f32 %v132, %v136
    %v143 = vmax.f32 %v131, %v135
    %v144 = vmax.f32 %v132, %v136
    %v145 = vmin.f32 %v141, %v139
    %v146 = vmin.f32 %v142, %v140
    %v147 = vmax.f32 %v141, %v139
    %v148 = vmax.f32 %v142, %v140
    %v149 = vmin.f32 %v37, %v40
    %v150 = vmin.f32 %v38, %v41
    %v151 = vmax.f32 %v37, %v40
    %v152 = vmax.f32 %v38, %v41
    %v153 = vmin.f32 %v43, %v45
    %v154 = vmin.f32 %v44, %v46
    %v155 = vmax.f32 %v43, %v45
    %v156 = vmax.f32 %v44, %v46
    %v157 = vmin.f32 %v149, %v153
    %v158 = vmin.f32 %v150, %v154
    %v159 = vmax.f32 %v149, %v153
    %v160 = vmax.f32 %v150, %v154
    %v161 = vmin.f32 %v151, %v155
    %v162 = vmin.f32 %v152, %v156
    %v163 = vmax.f32 %v151, %v155
    %v164 = vmax.f32 %v152, %v156
    %v165 = vmin.f32 %v161, %v159
    %v166 = vmin.f32 %v162, %v160
    %v167 = vmax.f32 %v161, %v159
    %v168 = vmax.f32 %v162, %v160
    %v169 = vmin.f32 %v137, %v157
    %v170 = vmin.f32 %v138, %v158
    %v171 = vmax.f32 %v137, %v157
    %v172 = vmax.f32 %v138, %v158
    %v173 = vmin.f32 %v147, %v167
    %v174 = vmin.f32 %v148, %v168
    %v175 = vmax.f32 %v147, %v167
    %v176 = vmax.f32 %v148, %v168
    %v177 = vmin.f32 %v173, %v171
    %v178 = vmin.f32 %v174, %v172
    %v179 = vmax.f32 %v173, %v171
    %v180 = vmax.f32 %v174, %v172
    %v181 = vmin.f32 %v145, %v165
    %v182 = vmin.f32 %v146, %v166
    %v183 = vmax.f32 %v145, %v165
    %v184 = vmax.f32 %v146, %v166
    %v185 = vmin.f32 %v143, %v163
    %v186 = vmin.f32 %v144, %v164
    %v187 = vmax.f32 %v143, %v163
    %v188 = vmax.f32 %v144, %v164
    %v189 = vmin.f32 %v185, %v183
    %v190 = vmin.f32 %v186, %v184
    %v191 = vmax.f32 %v185, %v183
    %v192 = vmax.f32 %v186, %v184
    %v193 = vmin.f32 %v181, %v177
    %v194 = vmin.f32 %v182, %v178
    %v195 = vmax.f32 %v181, %v177
    %v196 = vmax.f32 %v182, %v178
    %v197 = vmin.f32 %v189, %v179
    %v198 = vmin.f32 %v190, %v180
    %v199 = vmax.f32 %v189, %v179
    %v200 = vmax.f32 %v190, %v180
    %v201 = vmin.f32 %v191, %v175
    %v202 = vmin.f32 %v192, %v176
    %v203 = vmax.f32 %v191, %v175
    %v204 = vmax.f32 %v192, %v176
    %v205 = vmin.f32 %v47, %v49
    %v206 = vmin.f32 %v48, %v50
    %v207 = vmax.f32 %v47, %v49
    %v208 = vmax.f32 %v48, %v50
    %v209 = vmin.f32 %v51, %v53
    %v210 = vmin.f32 %v52, %v54
    %v211 = vmax.f32 %v51, %v53
    %v212 = vmax.f32 %v52, %v54
    %v213 = vmin.f32 %v205, %v209
    %v214 = vmin.f32 %v206, %v210
    %v215 = vmax.f32 %v205, %v209
    %v216 = vmax.f32 %v206, %v210
    %v217 = vmin.f32 %v207, %v211
    %v218 = vmin.f32 %v208, %v212
    %v219 = vmax.f32 %v207, %v211
    %v220 = vmax.f32 %v208, %v212
    %v221 = vmin.f32 %v217, %v215
    %v222 = vmin.f32 %v218, %v216
    %v223 = vmax.f32 %v217, %v215
    %v224 = vmax.f32 %v218, %v216
    %v225 = vmin.f32 %v55, %v57
    %v226 = vmin.f32 %v56, %v58
    %v227 = vmax.f32 %v55, %v57
    %v228 = vmax.f32 %v56, %v58
    %v229 = vmin.f32 %v59, %v61
    %v230 = vmin.f32 %v60, %v62
    %v231 = vmax.f32 %v59, %v61
    %v232 = vmax.f32 %v60, %v62
    %v233 = vmin.f32 %v225, %v229
    %v234 = vmin.f32 %v226, %v230
    %v235 = vmax.f32 %v225, %v229
    %v236 = vmax.f32 %v226, %v230
    %v237 = vmin.f32 %v227, %v231
    %v238 = vmin.f32 %v228, %v232
    %v239 = vmax.f32 %v227, %v231
    %v240 = vmax.f32 %v228, %v232
    %v241 = vmin.f32 %v237, %v235
    %v242 = vmin.f32 %v238, %v236
    %v243 = vmax.f32 %v237, %v235
    %v244 = vmax.f32 %v238, %v236
    %v245 = vmin.f32 %v213, %v233
    %v246 = vmin.f32 %v214, %v234
    %v247 = vmax.f32 %v213, %v233
    %v248 = vmax.f32 %v214, %v234
    %v249 = vmin.f32 %v223, %v243
    %v250 = vmin.f32 %v224, %v244
    %v251 = vmax.f32 %v223, %v243
    %v252 = vmax.f32 %v224, %v244
    %v253 = vmin.f32 %v249, %v247
    %v254 = vmin.f32 %v250, %v248
    %v255 = vmax.f32 %v249, %v247
    %v256 = vmax.f32 %v250, %v248
    %v257 = vmin.f32 %v221, %v241
    %v258 = vmin.f32 %v222, %v242
    %v259 = vmax.f32 %v221, %v241
    %v260 = vmax.f32 %v222, %v242
    %v261 = vmin.f32 %v219, %v239
    %v262 = vmin.f32 %v220, %v240
    %v263 = vmax.f32 %v219, %v239
    %v264 = vmax.f32 %v220, %v240
    %v265 = vmin.f32 %v261, %v259
    %v266 = vmin.f32 %v262, %v260
    %v267 = vmax.f32 %v261, %v259
    %v268 = vmax.f32 %v262, %v260
    %v269 = vmin.f32 %v257, %v253
    %v270 = vmin.f32 %v258, %v254
    %v271 = vmax.f32 %v257, %v253
    %v272 = vmax.f32 %v258, %v254
    %v273 = vmin.f32 %v265, %v255
    %v274 = vmin.f32 %v266, %v256
    %v275 = vmax.f32 %v265, %v255
    %v276 = vmax.f32 %v266, %v256
    %v277 = vmin.f32 %v267, %v251
    %v278 = vmin.f32 %v268, %v252
    %v279 = vmax.f32 %v267, %v251
    %v280 = vmax.f32 %v268, %v252
    %v281 = vmin.f32 %v169, %v245
    %v282 = vmin.f32 %v170, %v246
    %v283 = vmax.f32 %v169, %v245
    %v284 = vmax.f32 %v170, %v246
    %v285 = vmin.f32 %v199, %v275
    %v286 = vmin.f32 %v200, %v276
    %v287 = vmax.f32 %v199, %v275
    %v288 = vmax.f32 %v200, %v276
    %v289 = vmin.f32 %v285, %v283
    %v290 = vmin.f32 %v286, %v284
    %v291 = vmax.f32 %v285, %v283
    %v292 = vmax.f32 %v286, %v284
    %v293 = vmin.f32 %v195, %v271
    %v294 = vmin.f32 %v196, %v272
    %v295 = vmax.f32 %v195, %v271
    %v296 = vmax.f32 %v196, %v272
    %v297 = vmin.f32 %v203, %v279
    %v298 = vmin.f32 %v204, %v280
    %v299 = vmax.f32 %v203, %v279
    %v300 = vmax.f32 %v204, %v280
    %v301 = vmin.f32 %v297, %v295
    %v302 = vmin.f32 %v298, %v296
    %v303 = vmax.f32 %v297, %v295
    %v304 = vmax.f32 %v298, %v296
    %v305 = vmin.f32 %v293, %v289
    %v306 = vmin.f32 %v294, %v290
    %v307 = vmax.f32 %v293, %v289
    %v308 = vmax.f32 %v294, %v290
    %v309 = vmin.f32 %v301, %v291
    %v310 = vmin.f32 %v302, %v292
    %v311 = vmax.f32 %v301, %v291
    %v312 = vmax.f32 %v302, %v292
    %v313 = vmin.f32 %v303, %v287
    %v314 = vmin.f32 %v304, %v288
    %v315 = vmax.f32 %v303, %v287
    %v316 = vmax.f32 %v304, %v288
    %v317 = vmin.f32 %v193, %v269
    %v318 = vmin.f32 %v194, %v270
    %v319 = vmax.f32 %v193, %v269
    %v320 = vmax.f32 %v194, %v270
    %v321 = vmin.f32 %v201, %v277
    %v322 = vmin.f32 %v202, %v278
    %v323 = vmax.f32 %v201, %v277
    %v324 = vmax.f32 %v202, %v278
    %v325 = vmin.f32 %v321, %v319
    %v326 = vmin.f32 %v322, %v320
    %v327 = vmax.f32 %v321, %v319
    %v328 = vmax.f32 %v322, %v320
    %v329 = vmin.f32 %v197, %v273
    %v330 = vmin.f32 %v198, %v274
    %v331 = vmax.f32 %v197, %v273
    %v332 = vmax.f32 %v198, %v274
    %v333 = vmin.f32 %v187, %v263
    %v334 = vmin.f32 %v188, %v264
    %v335 = vmax.f32 %v187, %v263
    %v336 = vmax.f32 %v188, %v264
    %v337 = vmin.f32 %v333, %v331
    %v338 = vmin.f32 %v334, %v332
    %v339 = vmax.f32 %v333, %v331
    %v340 = vmax.f32 %v334, %v332
    %v341 = vmin.f32 %v329, %v325
    %v342 = vmin.f32 %v330, %v326
    %v343 = vmax.f32 %v329, %v325
    %v344 = vmax.f32 %v330, %v326
    %v345 = vmin.f32 %v337, %v327
    %v346 = vmin.f32 %v338, %v328
    %v347 = vmax.f32 %v337, %v327
    %v348 = vmax.f32 %v338, %v328
    %v349 = vmin.f32 %v339, %v323
    %v350 = vmin.f32 %v340, %v324
    %v351 = vmax.f32 %v339, %v323
    %v352 = vmax.f32 %v340, %v324
    %v353 = vmin.f32 %v317, %v305
    %v354 = vmin.f32 %v318, %v306
    %v355 = vmax.f32 %v317, %v305
    %v356 = vmax.f32 %v318, %v306
    %v357 = vmin.f32 %v341, %v307
    %v358 = vmin.f32 %v342, %v308
    %v359 = vmax.f32 %v341, %v307
    %v360 = vmax.f32 %v342, %v308
    %v361 = vmin.f32 %v343, %v309
    %v362 = vmin.f32 %v344, %v310
    %v363 = vmax.f32 %v343, %v309
    %v364 = vmax.f32 %v344, %v310
    %v365 = vmin.f32 %v345, %v311
    %v366 = vmin.f32 %v346, %v312
    %v367 = vmax.f32 %v345, %v311
    %v368 = vmax.f32 %v346, %v312
    %v369 = vmin.f32 %v347, %v313
    %v370 = vmin.f32 %v348, %v314
    %v371 = vmax.f32 %v347, %v313
    %v372 = vmax.f32 %v348, %v314
    %v373 = vmin.f32 %v349, %v315
    %v374 = vmin.f32 %v350, %v316
    %v375 = vmax.f32 %v349, %v315
    %v376 = vmax.f32 %v350, %v316
    %v377 = vmin.f32 %v351, %v299
    %v378 = vmin.f32 %v352, %v300
    %v379 = vmax.f32 %v351, %v299
    %v380 = vmax.f32 %v352, %v300
    %v381 = vmin.f32 %v63, %v65
    %v382 = vmin.f32 %v64, %v66
    %v383 = vmax.f32 %v63, %v65
    %v384 = vmax.f32 %v64, %v66
    %v385 = vmin.f32 %v67, %v69
    %v386 = vmin.f32 %v68, %v70
    %v387 = vmax.f32 %v67, %v69
    %v388 = vmax.f32 %v68, %v70
    %v389 = vmin.f32 %v381, %v385
    %v390 = vmin.f32 %v382, %v386
    %v391 = vmax.f32 %v381, %v385
    %v392 = vmax.f32 %v382, %v386
    %v393 = vmin.f32 %v383, %v387
    %v394 = vmin.f32 %v384, %v388
    %v395 = vmax.f32 %v383, %v387
    %v396 = vmax.f32 %v384, %v388
    %v397 = vmin.f32 %v393, %v391
    %v398 = vmin.f32 %v394, %v392
    %v399 = vmax.f32 %v393, %v391
    %v400 = vmax.f32 %v394, %v392
    %v401 = vmin.f32 %v71, %v73
    %v402 = vmin.f32 %v72, %v74
    %v403 = vmax.f32 %v71, %v73
    %v404 = vmax.f32 %v72, %v74
    %v405 = vmin.f32 %v75, %v77
    %v406 = vmin.f32 %v76, %v78
    %v407 = vmax.f32 %v75, %v77
    %v408 = vmax.f32 %v76, %v78
    %v409 = vmin.f32 %v401, %v405
    %v410 = vmin.f32 %v402, %v406
    %v411 = vmax.f32 %v401, %v405
    %v412 = vmax.f32 %v402, %v406
    %v413 = vmin.f32 %v403, %v407
    %v414 = vmin.f32 %v404, %v408
    %v415 = vmax.f32 %v403, %v407
    %v416 = vmax.f32 %v404, %v408
    %v417 = vmin.f32 %v413, %v411
    %v418 = vmin.f32 %v414, %v412
    %v419 = vmax.f32 %v413, %v411
    %v420 = vmax.f32 %v414, %v412
    %v421 = vmin.f32 %v389, %v409
    %v422 = vmin.f32 %v390, %v410
    %v423 = vmax.f32 %v389, %v409
    %v424 = vmax.f32 %v390, %v410
    %v425 = vmin.f32 %v399, %v419
    %v426 = vmin.f32 %v400, %v420
    %v427 = vmax.f32 %v399, %v419
    %v428 = vmax.f32 %v400, %v420
    %v429 = vmin.f32 %v425, %v423
    %v430 = vmin.f32 %v426, %v424
    %v431 = vmax.f32 %v425, %v423
    %v432 = vmax.f32 %v426, %v424
    %v433 = vmin.f32 %v397, %v417
    %v434 = vmin.f32 %v398, %v418
    %v435 = vmax.f32 %v397, %v417
    %v436 = vmax.f32 %v398, %v418
    %v437 = vmin.f32 %v395, %v415
    %v438 = vmin.f32 %v396, %v416
    %v439 = vmax.f32 %v395, %v415
    %v440 = vmax.f32 %v396, %v416
    %v441 = vmin.f32 %v437, %v435
    %v442 = vmin.f32 %v438, %v436
    %v443 = vmax.f32 %v437, %v435
    %v444 = vmax.f32 %v438, %v436
    %v445 = vmin.f32 %v433, %v429
    %v446 = vmin.f32 %v434, %v430
    %v447 = vmax.f32 %v433, %v429
    %v448 = vmax.f32 %v434, %v430
    %v449 = vmin.f32 %v441, %v431
    %v450 = vmin.f32 %v442, %v432
    %v451 = vmax.f32 %v441, %v431
    %v452 = vmax.f32 %v442, %v432
    %v453 = vmin.f32 %v443, %v427
    %v454 = vmin.f32 %v444, %v428
    %v455 = vmax.f32 %v443, %v427
    %v456 = vmax.f32 %v444, %v428
    %v457 = vmin.f32 %v79, %v81
    %v458 = vmin.f32 %v80, %v82
    %v459 = vmax.f32 %v79, %v81
    %v460 = vmax.f32 %v80, %v82
    %v461 = vmin.f32 %v83, %v85
    %v462 = vmin.f32 %v84, %v86
    %v463 = vmax.f32 %v83, %v85
    %v464 = vmax.f32 %v84, %v86
    %v465 = vmin.f32 %v457, %v461
    %v466 = vmin.f32 %v458, %v462
    %v467 = vmax.f32 %v457, %v461
    %v468 = vmax.f32 %v458, %v462
    %v469 = vmin.f32 %v459, %v463
    %v470 = vmin.f32 %v460, %v464
    %v471 = vmax.f32 %v459, %v463
    %v472 = vmax.f32 %v460, %v464
    %v473 = vmin.f32 %v469, %v467
    %v474 = vmin.f32 %v470, %v468
    %v475 = vmax.f32 %v469, %v467
    %v476 = vmax.f32 %v470, %v468
    %v477 = vmin.f32 %v87, %v89
    %v478 = vmin.f32 %v88, %v90
    %v479 = vmax.f32 %v87, %v89
    %v480 = vmax.f32 %v88, %v90
    %v481 = vmin.f32 %v91, %v93
    %v482 = vmin.f32 %v92, %v94
    %v483 = vmax.f32 %v91, %v93
    %v484 = vmax.f32 %v92, %v94
    %v485 = vmin.f32 %v477, %v481
    %v486 = vmin.f32 %v478, %v482
    %v487 = vmax.f32 %v477, %v481
    %v488 = vmax.f32 %v478, %v482
    %v489 = vmin.f32 %v479, %v483
    %v490 = vmin.f32 %v480, %v484
    %v491 = vmax.f32 %v479, %v483
    %v492 = vmax.f32 %v480, %v484
    %v493 = vmin.f32 %v489, %v487
    %v494 = vmin.f32 %v490, %v488
    %v495 = vmax.f32 %v489, %v487
    %v496 = vmax.f32 %v490, %v488
    %v497 = vmin.f32 %v465, %v485
    %v498 = vmin.f32 %v466, %v486
    %v499 = vmax.f32 %v465, %v485
    %v500 = vmax.f32 %v466, %v486
    %v501 = vmin.f32 %v475, %v495
    %v502 = vmin.f32 %v476, %v496
    %v503 = vmax.f32 %v475, %v495
    %v504 = vmax.f32 %v476, %v496
    %v505 = vmin.f32 %v501, %v499
    %v506 = vmin.f32 %v502, %v500
    %v507 = vmax.f32 %v501, %v499
    %v508 = vmax.f32 %v502, %v500
    %v509 = vmin.f32 %v473, %v493
    %v510 = vmin.f32 %v474, %v494
    %v511 = vmax.f32 %v473, %v493
    %v512 = vmax.f32 %v474, %v494
    %v513 = vmin.f32 %v471, %v491
    %v514 = vmin.f32 %v472, %v492
    %v515 = vmax.f32 %v471, %v491
    %v516 = vmax.f32 %v472, %v492
    %v517 = vmin.f32 %v513, %v511
    %v518 = vmin.f32 %v514, %v512
    %v519 = vmax.f32 %v513, %v511
    %v520 = vmax.f32 %v514, %v512
    %v521 = vmin.f32 %v509, %v505
    %v522 = vmin.f32 %v510, %v506
    %v523 = vmax.f32 %v509, %v505
    %v524 = vmax.f32 %v510, %v506
    %v525 = vmin.f32 %v517, %v507
    %v526 = vmin.f32 %v518, %v508
    %v527 = vmax.f32 %v517, %v507
    %v528 = vmax.f32 %v518, %v508
    %v529 = vmin.f32 %v519, %v503
    %v530 = vmin.f32 %v520, %v504
    %v531 = vmax.f32 %v519, %v503
    %v532 = vmax.f32 %v520, %v504
    %v533 = vmin.f32 %v421, %v497
    %v534 = vmin.f32 %v422, %v498
    %v535 = vmax.f32 %v421, %v497
    %v536 = vmax.f32 %v422, %v498
    %v537 = vmin.f32 %v451, %v527
    %v538 = vmin.f32 %v452, %v528
    %v539 = vmax.f32 %v451, %v527
    %v540 = vmax.f32 %v452, %v528
    %v541 = vmin.f32 %v537, %v535
    %v542 = vmin.f32 %v538, %v536
    %v543 = vmax.f32 %v537, %v535
    %v544 = vmax.f32 %v538, %v536
    %v545 = vmin.f32 %v447, %v523
    %v546 = vmin.f32 %v448, %v524
    %v547 = vmax.f32 %v447, %v523
    %v548 = vmax.f32 %v448, %v524
    %v549 = vmin.f32 %v455, %v531
    %v550 = vmin.f32 %v456, %v532
    %v551 = vmax.f32 %v455, %v531
    %v552 = vmax.f32 %v456, %v532
    %v553 = vmin.f32 %v549, %v547
    %v554 = vmin.f32 %v550, %v548
    %v555 = vmax.f32 %v549, %v547
    %v556 = vmax.f32 %v550, %v548
    %v557 = vmin.f32 %v545, %v541
    %v558 = vmin.f32 %v546, %v542
    %v559 = vmax.f32 %v545, %v541
    %v560 = vmax.f32 %v546, %v542
    %v561 = vmin.f32 %v553, %v543
    %v562 = vmin.f32 %v554, %v544
    %v563 = vmax.f32 %v553, %v543
    %v564 = vmax.f32 %v554, %v544
    %v565 = vmin.f32 %v555, %v539
    %v566 = vmin.f32 %v556, %v540
    %v567 = vmax.f32 %v555, %v539
    %v568 = vmax.f32 %v556, %v540
    %v569 = vmin.f32 %v445, %v521
    %v570 = vmin.f32 %v446, %v522
    %v571 = vmax.f32 %v445, %v521
    %v572 = vmax.f32 %v446, %v522
    %v573 = vmin.f32 %v453, %v529
    %v574 = vmin.f32 %v454, %v530
    %v575 = vmax.f32 %v453, %v529
    %v576 = vmax.f32 %v454, %v530
    %v577 = vmin.f32 %v573, %v571
    %v578 = vmin.f32 %v574, %v572
    %v579 = vmax.f32 %v573, %v571
    %v580 = vmax.f32 %v574, %v572
    %v581 = vmin.f32 %v449, %v525
    %v582 = vmin.f32 %v450, %v526
    %v583 = vmax.f32 %v449, %v525
    %v584 = vmax.f32 %v450, %v526
    %v585 = vmin.f32 %v439, %v515
    %v586 = vmin.f32 %v440, %v516
    %v587 = vmax.f32 %v439, %v515
    %v588 = vmax.f32 %v440, %v516
    %v589 = vmin.f32 %v585, %v583
    %v590 = vmin.f32 %v586, %v584
    %v591 = vmax.f32 %v585, %v583
    %v592 = vmax.f32 %v586, %v584
    %v593 = vmin.f32 %v581, %v577
    %v594 = vmin.f32 %v582, %v578
    %v595 = vmax.f32 %v581, %v577
    %v596 = vmax.f32 %v582, %v578
    %v597 = vmin.f32 %v589, %v579
    %v598 = vmin.f32 %v590, %v580
    %v599 = vmax.f32 %v589, %v579
    %v600 = vmax.f32 %v590, %v580
    %v601 = vmin.f32 %v591, %v575
    %v602 = vmin.f32 %v592, %v576
    %v603 = vmax.f32 %v591, %v575
    %v604 = vmax.f32 %v592, %v576
    %v605 = vmin.f32 %v569, %v557
    %v606 = vmin.f32 %v570, %v558
    %v607 = vmax.f32 %v569, %v557
    %v608 = vmax.f32 %v570, %v558
    %v609 = vmin.f32 %v593, %v559
    %v610 = vmin.f32 %v594, %v560
    %v611 = vmax.f32 %v593, %v559
    %v612 = vmax.f32 %v594, %v560
    %v613 = vmin.f32 %v595, %v561
    %v614 = vmin.f32 %v596, %v562
    %v615 = vmax.f32 %v595, %v561
    %v616 = vmax.f32 %v596, %v562
    %v617 = vmin.f32 %v597, %v563
    %v618 = vmin.f32 %v598, %v564
    %v619 = vmax.f32 %v597, %v563
    %v620 = vmax.f32 %v598, %v564
    %v621 = vmin.f32 %v599, %v565
    %v622 = vmin.f32 %v600, %v566
    %v623 = vmax.f32 %v599, %v565
    %v624 = vmax.f32 %v600, %v566
    %v625 = vmin.f32 %v601, %v567
    %v626 = vmin.f32 %v602, %v568
    %v627 = vmax.f32 %v601, %v567
    %v628 = vmax.f32 %v602, %v568
    %v629 = vmin.f32 %v603, %v551
    %v630 = vmin.f32 %v604, %v552
    %v631 = vmax.f32 %v603, %v551
    %v632 = vmax.f32 %v604, %v552
    %v633 = vmin.f32 %v281, %v533
    %v634 = vmin.f32 %v282, %v534
    %v635 = vmax.f32 %v281, %v533
    %v636 = vmax.f32 %v282, %v534
    %v637 = vmin.f32 %v367, %v619
    %v638 = vmin.f32 %v368, %v620
    %v639 = vmax.f32 %v367, %v619
    %v640 = vmax.f32 %v368, %v620
    %v641 = vmin.f32 %v637, %v635
    %v642 = vmin.f32 %v638, %v636
    %v643 = vmax.f32 %v637, %v635
    %v644 = vmax.f32 %v638, %v636
    %v645 = vmin.f32 %v359, %v611
    %v646 = vmin.f32 %v360, %v612
    %v647 = vmax.f32 %v359, %v611
    %v648 = vmax.f32 %v360, %v612
    %v649 = vmin.f32 %v375, %v627
    %v650 = vmin.f32 %v376, %v628
    %v651 = vmax.f32 %v375, %v627
    %v652 = vmax.f32 %v376, %v628
    %v653 = vmin.f32 %v649, %v647
    %v654 = vmin.f32 %v650, %v648
    %v655 = vmax.f32 %v649, %v647
    %v656 = vmax.f32 %v650, %v648
    %v657 = vmin.f32 %v645, %v641
    %v658 = vmin.f32 %v646, %v642
    %v659 = vmax.f32 %v645, %v641
    %v660 = vmax.f32 %v646, %v642
    %v661 = vmin.f32 %v653, %v643
    %v662 = vmin.f32 %v654, %v644
    %v663 = vmax.f32 %v653, %v643
    %v664 = vmax.f32 %v654, %v644
    %v665 = vmin.f32 %v655, %v639
    %v666 = vmin.f32 %v656, %v640
    %v667 = vmax.f32 %v655, %v639
    %v668 = vmax.f32 %v656, %v640
    %v669 = vmin.f32 %v355, %v607
    %v670 = vmin.f32 %v356, %v608
    %v671 = vmax.f32 %v355, %v607
    %v672 = vmax.f32 %v356, %v608
    %v673 = vmin.f32 %v371, %v623
    %v674 = vmin.f32 %v372, %v624
    %v675 = vmax.f32 %v371, %v623
    %v676 = vmax.f32 %v372, %v624
    %v677 = vmin.f32 %v673, %v671
    %v678 = vmin.f32 %v674, %v672
    %v679 = vmax.f32 %v673, %v671
    %v680 = vmax.f32 %v674, %v672
    %v681 = vmin.f32 %v363, %v615
    %v682 = vmin.f32 %v364, %v616
    %v683 = vmax.f32 %v363, %v615
    %v684 = vmax.f32 %v364, %v616
    %v685 = vmin.f32 %v379, %v631
    %v686 = vmin.f32 %v380, %v632
    %v687 = vmin.f32 %v685, %v683
    %v688 = vmin.f32 %v686, %v684
    %v689 = vmax.f32 %v685, %v683
    %v690 = vmax.f32 %v686, %v684
    %v691 = vmin.f32 %v681, %v677
    %v692 = vmin.f32 %v682, %v678
    %v693 = vmax.f32 %v681, %v677
    %v694 = vmax.f32 %v682, %v678
    %v695 = vmin.f32 %v687, %v679
    %v696 = vmin.f32 %v688, %v680
    %v697 = vmax.f32 %v687, %v679
    %v698 = vmax.f32 %v688, %v680
    %v699 = vmin.f32 %v689, %v675
    %v700 = vmin.f32 %v690, %v676
    %v701 = vmax.f32 %v689, %v675
    %v702 = vmax.f32 %v690, %v676
    %v703 = vmin.f32 %v669, %v657
    %v704 = vmin.f32 %v670, %v658
    %v705 = vmax.f32 %v669, %v657
    %v706 = vmax.f32 %v670, %v658
    %v707 = vmin.f32 %v691, %v659
    %v708 = vmin.f32 %v692, %v660
    %v709 = vmax.f32 %v691, %v659
    %v710 = vmax.f32 %v692, %v660
    %v711 = vmin.f32 %v693, %v661
    %v712 = vmin.f32 %v694, %v662
    %v713 = vmax.f32 %v693, %v661
    %v714 = vmax.f32 %v694, %v662
    %v715 = vmin.f32 %v695, %v663
    %v716 = vmin.f32 %v696, %v664
    %v717 = vmax.f32 %v695, %v663
    %v718 = vmax.f32 %v696, %v664
    %v719 = vmin.f32 %v697, %v665
    %v720 = vmin.f32 %v698, %v666
    %v721 = vmax.f32 %v697, %v665
    %v722 = vmax.f32 %v698, %v666
    %v723 = vmin.f32 %v699, %v667
    %v724 = vmin.f32 %v700, %v668
    %v725 = vmax.f32 %v699, %v667
    %v726 = vmax.f32 %v700, %v668
    %v727 = vmin.f32 %v701, %v651
    %v728 = vmin.f32 %v702, %v652
    %v729 = vmax.f32 %v701, %v651
    %v730 = vmax.f32 %v702, %v652
    %v731 = vmin.f32 %v353, %v605
    %v732 = vmin.f32 %v354, %v606
    %v733 = vmax.f32 %v353, %v605
    %v734 = vmax.f32 %v354, %v606
    %v735 = vmin.f32 %v369, %v621
    %v736 = vmin.f32 %v370, %v622
    %v737 = vmax.f32 %v369, %v621
    %v738 = vmax.f32 %v370, %v622
    %v739 = vmin.f32 %v735, %v733
    %v740 = vmin.f32 %v736, %v734
    %v741 = vmax.f32 %v735, %v733
    %v742 = vmax.f32 %v736, %v734
    %v743 = vmin.f32 %v361, %v613
    %v744 = vmin.f32 %v362, %v614
    %v745 = vmax.f32 %v361, %v613
    %v746 = vmax.f32 %v362, %v614
    %v747 = vmin.f32 %v377, %v629
    %v748 = vmin.f32 %v378, %v630
    %v749 = vmax.f32 %v377, %v629
    %v750 = vmax.f32 %v378, %v630
    %v751 = vmin.f32 %v747, %v745
    %v752 = vmin.f32 %v748, %v746
    %v753 = vmax.f32 %v747, %v745
    %v754 = vmax.f32 %v748, %v746
    %v755 = vmin.f32 %v743, %v739
    %v756 = vmin.f32 %v744, %v740
    %v757 = vmax.f32 %v743, %v739
    %v758 = vmax.f32 %v744, %v740
    %v759 = vmin.f32 %v751, %v741
    %v760 = vmin.f32 %v752, %v742
    %v761 = vmax.f32 %v751, %v741
    %v762 = vmax.f32 %v752, %v742
    %v763 = vmin.f32 %v753, %v737
    %v764 = vmin.f32 %v754, %v738
    %v765 = vmax.f32 %v753, %v737
    %v766 = vmax.f32 %v754, %v738
    %v767 = vmin.f32 %v357, %v609
    %v768 = vmin.f32 %v358, %v610
    %v769 = vmax.f32 %v357, %v609
    %v770 = vmax.f32 %v358, %v610
    %v771 = vmin.f32 %v373, %v625
    %v772 = vmin.f32 %v374, %v626
    %v773 = vmax.f32 %v373, %v625
    %v774 = vmax.f32 %v374, %v626
    %v775 = vmin.f32 %v771, %v769
    %v776 = vmin.f32 %v772, %v770
    %v777 = vmax.f32 %v771, %v769
    %v778 = vmax.f32 %v772, %v770
    %v779 = vmin.f32 %v365, %v617
    %v780 = vmin.f32 %v366, %v618
    %v781 = vmax.f32 %v365, %v617
    %v782 = vmax.f32 %v366, %v618
    %v783 = vmin.f32 %v335, %v587
    %v784 = vmin.f32 %v336, %v588
    %v785 = vmin.f32 %v783, %v781
    %v786 = vmin.f32 %v784, %v782
    %v787 = vmax.f32 %v783, %v781
    %v788 = vmax.f32 %v784, %v782
    %v789 = vmin.f32 %v779, %v775
    %v790 = vmin.f32 %v780, %v776
    %v791 = vmax.f32 %v779, %v775
    %v792 = vmax.f32 %v780, %v776
    %v793 = vmin.f32 %v785, %v777
    %v794 = vmin.f32 %v786, %v778
    %v795 = vmax.f32 %v785, %v777
    %v796 = vmax.f32 %v786, %v778
    %v797 = vmin.f32 %v787, %v773
    %v798 = vmin.f32 %v788, %v774
    %v799 = vmax.f32 %v787, %v773
    %v800 = vmax.f32 %v788, %v774
    %v801 = vmin.f32 %v767, %v755
    %v802 = vmin.f32 %v768, %v756
    %v803 = vmax.f32 %v767, %v755
    %v804 = vmax.f32 %v768, %v756
    %v805 = vmin.f32 %v789, %v757
    %v806 = vmin.f32 %v790, %v758
    %v807 = vmax.f32 %v789, %v757
    %v808 = vmax.f32 %v790, %v758
    %v809 = vmin.f32 %v791, %v759
    %v810 = vmin.f32 %v792, %v760
    %v811 = vmax.f32 %v791, %v759
    %v812 = vmax.f32 %v792, %v760
    %v813 = vmin.f32 %v793, %v761
    %v814 = vmin.f32 %v794, %v762
    %v815 = vmax.f32 %v793, %v761
    %v816 = vmax.f32 %v794, %v762
    %v817 = vmin.f32 %v795, %v763
    %v818 = vmin.f32 %v796, %v764
    %v819 = vmax.f32 %v795, %v763
    %v820 = vmax.f32 %v796, %v764
    %v821 = vmin.f32 %v797, %v765
    %v822 = vmin.f32 %v798, %v766
    %v823 = vmax.f32 %v797, %v765
    %v824 = vmax.f32 %v798, %v766
    %v825 = vmin.f32 %v799, %v749
    %v826 = vmin.f32 %v800, %v750
    %v827 = vmin.f32 %v731, %v703
    %v828 = vmin.f32 %v732, %v704
    %v829 = vmax.f32 %v731, %v703
    %v830 = vmax.f32 %v732, %v704
    %v831 = vmin.f32 %v801, %v705
    %v832 = vmin.f32 %v802, %v706
    %v833 = vmax.f32 %v801, %v705
    %v834 = vmax.f32 %v802, %v706
    %v835 = vmin.f32 %v803, %v707
    %v836 = vmin.f32 %v804, %v708
    %v837 = vmax.f32 %v803, %v707
    %v838 = vmax.f32 %v804, %v708
    %v839 = vmin.f32 %v805, %v709
    %v840 = vmin.f32 %v806, %v710
    %v841 = vmax.f32 %v805, %v709
    %v842 = vmax.f32 %v806, %v710
    %v843 = vmin.f32 %v807, %v711
    %v844 = vmin.f32 %v808, %v712
    %v845 = vmax.f32 %v807, %v711
    %v846 = vmax.f32 %v808, %v712
    %v847 = vmin.f32 %v809, %v713
    %v848 = vmin.f32 %v810, %v714
    %v849 = vmax.f32 %v809, %v713
    %v850 = vmax.f32 %v810, %v714
    %v851 = vmin.f32 %v811, %v715
    %v852 = vmin.f32 %v812, %v716
    %v853 = vmax.f32 %v811, %v715
    %v854 = vmax.f32 %v812, %v716
    %v855 = vmin.f32 %v813, %v717
    %v856 = vmin.f32 %v814, %v718
    %v857 = vmax.f32 %v813, %v717
    %v858 = vmax.f32 %v814, %v718
    %v859 = vmin.f32 %v815, %v719
    %v860 = vmin.f32 %v816, %v720
    %v861 = vmax.f32 %v815, %v719
    %v862 = vmax.f32 %v816, %v720
    %v863 = vmin.f32 %v817, %v721
    %v864 = vmin.f32 %v818, %v722
    %v865 = vmax.f32 %v817, %v721
    %v866 = vmax.f32 %v818, %v722
    %v867 = vmin.f32 %v819, %v723
    %v868 = vmin.f32 %v820, %v724
    %v869 = vmax.f32 %v819, %v723
    %v870 = vmax.f32 %v820, %v724
    %v871 = vmin.f32 %v821, %v725
    %v872 = vmin.f32 %v822, %v726
    %v873 = vmax.f32 %v821, %v725
    %v874 = vmax.f32 %v822, %v726
    %v875 = vmin.f32 %v823, %v727
    %v876 = vmin.f32 %v824, %v728
    %v877 = vmax.f32 %v823, %v727
    %v878 = vmax.f32 %v824, %v728
    %v879 = vmin.f32 %v825, %v729
    %v880 = vmin.f32 %v826, %v730
    %v881 = vmin.f32 %v95, %v97
    %v882 = vmin.f32 %v96, %v98
    %v883 = vmax.f32 %v95, %v97
    %v884 = vmax.f32 %v96, %v98
    %v885 = vmin.f32 %v99, %v101
    %v886 = vmin.f32 %v100, %v102
    %v887 = vmax.f32 %v99, %v101
    %v888 = vmax.f32 %v100, %v102
    %v889 = vmin.f32 %v881, %v885
    %v890 = vmin.f32 %v882, %v886
    %v891 = vmax.f32 %v881, %v885
    %v892 = vmax.f32 %v882, %v886
    %v893 = vmin.f32 %v883, %v887
    %v894 = vmin.f32 %v884, %v888
    %v895 = vmax.f32 %v883, %v887
    %v896 = vmax.f32 %v884, %v888
    %v897 = vmin.f32 %v893, %v891
    %v898 = vmin.f32 %v894, %v892
    %v899 = vmax.f32 %v893, %v891
    %v900 = vmax.f32 %v894, %v892
    %v901 = vmin.f32 %v103, %v105
    %v902 = vmin.f32 %v104, %v106
    %v903 = vmax.f32 %v103, %v105
    %v904 = vmax.f32 %v104, %v106
    %v905 = vmin.f32 %v107, %v109
    %v906 = vmin.f32 %v108, %v110
    %v907 = vmax.f32 %v107, %v109
    %v908 = vmax.f32 %v108, %v110
    %v909 = vmin.f32 %v901, %v905
    %v910 = vmin.f32 %v902, %v906
    %v911 = vmax.f32 %v901, %v905
    %v912 = vmax.f32 %v902, %v906
    %v913 = vmin.f32 %v903, %v907
    %v914 = vmin.f32 %v904, %v908
    %v915 = vmax.f32 %v903, %v907
    %v916 = vmax.f32 %v904, %v908
    %v917 = vmin.f32 %v913, %v911
    %v918 = vmin.f32 %v914, %v912
    %v919 = vmax.f32 %v913, %v911
    %v920 = vmax.f32 %v914, %v912
    %v921 = vmin.f32 %v889, %v909
    %v922 = vmin.f32 %v890, %v910
    %v923 = vmax.f32 %v889, %v909
    %v924 = vmax.f32 %v890, %v910
    %v925 = vmin.f32 %v899, %v919
    %v926 = vmin.f32 %v900, %v920
    %v927 = vmax.f32 %v899, %v919
    %v928 = vmax.f32 %v900, %v920
    %v929 = vmin.f32 %v925, %v923
    %v930 = vmin.f32 %v926, %v924
    %v931 = vmax.f32 %v925, %v923
    %v932 = vmax.f32 %v926, %v924
    %v933 = vmin.f32 %v897, %v917
    %v934 = vmin.f32 %v898, %v918
    %v935 = vmax.f32 %v897, %v917
    %v936 = vmax.f32 %v898, %v918
    %v937 = vmin.f32 %v895, %v915
    %v938 = vmin.f32 %v896, %v916
    %v939 = vmax.f32 %v895, %v915
    %v940 = vmax.f32 %v896, %v916
    %v941 = vmin.f32 %v937, %v935
    %v942 = vmin.f32 %v938, %v936
    %v943 = vmax.f32 %v937, %v935
    %v944 = vmax.f32 %v938, %v936
    %v945 = vmin.f32 %v933, %v929
    %v946 = vmin.f32 %v934, %v930
    %v947 = vmax.f32 %v933, %v929
    %v948 = vmax.f32 %v934, %v930
    %v949 = vmin.f32 %v941, %v931
    %v950 = vmin.f32 %v942, %v932
    %v951 = vmax.f32 %v941, %v931
    %v952 = vmax.f32 %v942, %v932
    %v953 = vmin.f32 %v943, %v927
    %v954 = vmin.f32 %v944, %v928
    %v955 = vmax.f32 %v943, %v927
    %v956 = vmax.f32 %v944, %v928
    %v957 = vmin.f32 %v111, %v113
    %v958 = vmin.f32 %v112, %v114
    %v959 = vmax.f32 %v111, %v113
    %v960 = vmax.f32 %v112, %v114
    %v961 = vmin.f32 %v115, %v117
    %v962 = vmin.f32 %v116, %v118
    %v963 = vmax.f32 %v115, %v117
    %v964 = vmax.f32 %v116, %v118
    %v965 = vmin.f32 %v957, %v961
    %v966 = vmin.f32 %v958, %v962
    %v967 = vmax.f32 %v957, %v961
    %v968 = vmax.f32 %v958, %v962
    %v969 = vmin.f32 %v959, %v963
    %v970 = vmin.f32 %v960, %v964
    %v971 = vmax.f32 %v959, %v963
    %v972 = vmax.f32 %v960, %v964
    %v973 = vmin.f32 %v969, %v967
    %v974 = vmin.f32 %v970, %v968
    %v975 = vmax.f32 %v969, %v967
    %v976 = vmax.f32 %v970, %v968
    %v977 = vmin.f32 %v119, %v121
    %v978 = vmin.f32 %v120, %v122
    %v979 = vmax.f32 %v119, %v121
    %v980 = vmax.f32 %v120, %v122
    %v981 = vmin.f32 %v123, %v125
    %v982 = vmin.f32 %v124, %v126
    %v983 = vmax.f32 %v123, %v125
    %v984 = vmax.f32 %v124, %v126
    %v985 = vmin.f32 %v977, %v981
    %v986 = vmin.f32 %v978, %v982
    %v987 = vmax.f32 %v977, %v981
    %v988 = vmax.f32 %v978, %v982
    %v989 = vmin.f32 %v979, %v983
    %v990 = vmin.f32 %v980, %v984
    %v991 = vmax.f32 %v979, %v983
    %v992 = vmax.f32 %v980, %v984
    %v993 = vmin.f32 %v989, %v987
    %v994 = vmin.f32 %v990, %v988
    %v995 = vmax.f32 %v989, %v987
    %v996 = vmax.f32 %v990, %v988
    %v997 = vmin.f32 %v965, %v985
    %v998 = vmin.f32 %v966, %v986
    %v999 = vmax.f32 %v965, %v985
    %v1000 = vmax.f32 %v966, %v986
    %v1001 = vmin.f32 %v975, %v995
    %v1002 = vmin.f32 %v976, %v996
    %v1003 = vmax.f32 %v975, %v995
    %v1004 = vmax.f32 %v976, %v996
    %v1005 = vmin.f32 %v1001, %v999
    %v1006 = vmin.f32 %v1002, %v1000
    %v1007 = vmax.f32 %v1001, %v999
    %v1008 = vmax.f32 %v1002, %v1000
    %v1009 = vmin.f32 %v973, %v993
    %v1010 = vmin.f32 %v974, %v994
    %v1011 = vmax.f32 %v973, %v993
    %v1012 = vmax.f32 %v974, %v994
    %v1013 = vmin.f32 %v971, %v991
    %v1014 = vmin.f32 %v972, %v992
    %v1015 = vmax.f32 %v971, %v991
    %v1016 = vmax.f32 %v972, %v992
    %v1017 = vmin.f32 %v1013, %v1011
    %v1018 = vmin.f32 %v1014, %v1012
    %v1019 = vmax.f32 %v1013, %v1011
    %v1020 = vmax.f32 %v1014, %v1012
    %v1021 = vmin.f32 %v1009, %v1005
    %v1022 = vmin.f32 %v1010, %v1006
    %v1023 = vmax.f32 %v1009, %v1005
    %v1024 = vmax.f32 %v1010, %v1006
    %v1025 = vmin.f32 %v1017, %v1007
    %v1026 = vmin.f32 %v1018, %v1008
    %v1027 = vmax.f32 %v1017, %v1007
    %v1028 = vmax.f32 %v1018, %v1008
    %v1029 = vmin.f32 %v1019, %v1003
    %v1030 = vmin.f32 %v1020, %v1004
    %v1031 = vmax.f32 %v1019, %v1003
    %v1032 = vmax.f32 %v1020, %v1004
    %v1033 = vmin.f32 %v921, %v997
    %v1034 = vmin.f32 %v922, %v998
    %v1035 = vmax.f32 %v921, %v997
    %v1036 = vmax.f32 %v922, %v998
    %v1037 = vmin.f32 %v951, %v1027
    %v1038 = vmin.f32 %v952, %v1028
    %v1039 = vmax.f32 %v951, %v1027
    %v1040 = vmax.f32 %v952, %v1028
    %v1041 = vmin.f32 %v1037, %v1035
    %v1042 = vmin.f32 %v1038, %v1036
    %v1043 = vmax.f32 %v1037, %v1035
    %v1044 = vmax.f32 %v1038, %v1036
    %v1045 = vmin.f32 %v947, %v1023
    %v1046 = vmin.f32 %v948, %v1024
    %v1047 = vmax.f32 %v947, %v1023
    %v1048 = vmax.f32 %v948, %v1024
    %v1049 = vmin.f32 %v955, %v1031
    %v1050 = vmin.f32 %v956, %v1032
    %v1051 = vmax.f32 %v955, %v1031
    %v1052 = vmax.f32 %v956, %v1032
    %v1053 = vmin.f32 %v1049, %v1047
    %v1054 = vmin.f32 %v1050, %v1048
    %v1055 = vmax.f32 %v1049, %v1047
    %v1056 = vmax.f32 %v1050, %v1048
    %v1057 = vmin.f32 %v1045, %v1041
    %v1058 = vmin.f32 %v1046, %v1042
    %v1059 = vmax.f32 %v1045, %v1041
    %v1060 = vmax.f32 %v1046, %v1042
    %v1061 = vmin.f32 %v1053, %v1043
    %v1062 = vmin.f32 %v1054, %v1044
    %v1063 = vmax.f32 %v1053, %v1043
    %v1064 = vmax.f32 %v1054, %v1044
    %v1065 = vmin.f32 %v1055, %v1039
    %v1066 = vmin.f32 %v1056, %v1040
    %v1067 = vmax.f32 %v1055, %v1039
    %v1068 = vmax.f32 %v1056, %v1040
    %v1069 = vmin.f32 %v945, %v1021
    %v1070 = vmin.f32 %v946, %v1022
    %v1071 = vmax.f32 %v945, %v1021
    %v1072 = vmax.f32 %v946, %v1022
    %v1073 = vmin.f32 %v953, %v1029
    %v1074 = vmin.f32 %v954, %v1030
    %v1075 = vmax.f32 %v953, %v1029
    %v1076 = vmax.f32 %v954, %v1030
    %v1077 = vmin.f32 %v1073, %v1071
    %v1078 = vmin.f32 %v1074, %v1072
    %v1079 = vmax.f32 %v1073, %v1071
    %v1080 = vmax.f32 %v1074, %v1072
    %v1081 = vmin.f32 %v949, %v1025
    %v1082 = vmin.f32 %v950, %v1026
    %v1083 = vmax.f32 %v949, %v1025
    %v1084 = vmax.f32 %v950, %v1026
    %v1085 = vmin.f32 %v939, %v1015
    %v1086 = vmin.f32 %v940, %v1016
    %v1087 = vmax.f32 %v939, %v1015
    %v1088 = vmax.f32 %v940, %v1016
    %v1089 = vmin.f32 %v1085, %v1083
    %v1090 = vmin.f32 %v1086, %v1084
    %v1091 = vmax.f32 %v1085, %v1083
    %v1092 = vmax.f32 %v1086, %v1084
    %v1093 = vmin.f32 %v1081, %v1077
    %v1094 = vmin.f32 %v1082, %v1078
    %v1095 = vmax.f32 %v1081, %v1077
    %v1096 = vmax.f32 %v1082, %v1078
    %v1097 = vmin.f32 %v1089, %v1079
    %v1098 = vmin.f32 %v1090, %v1080
    %v1099 = vmax.f32 %v1089, %v1079
    %v1100 = vmax.f32 %v1090, %v1080
    %v1101 = vmin.f32 %v1091, %v1075
    %v1102 = vmin.f32 %v1092, %v1076
    %v1103 = vmax.f32 %v1091, %v1075
    %v1104 = vmax.f32 %v1092, %v1076
    %v1105 = vmin.f32 %v1069, %v1057
    %v1106 = vmin.f32 %v1070, %v1058
    %v1107 = vmax.f32 %v1069, %v1057
    %v1108 = vmax.f32 %v1070, %v1058
    %v1109 = vmin.f32 %v1093, %v1059
    %v1110 = vmin.f32 %v1094, %v1060
    %v1111 = vmax.f32 %v1093, %v1059
    %v1112 = vmax.f32 %v1094, %v1060
    %v1113 = vmin.f32 %v1095, %v1061
    %v1114 = vmin.f32 %v1096, %v1062
    %v1115 = vmax.f32 %v1095, %v1061
    %v1116 = vmax.f32 %v1096, %v1062
    %v1117 = vmin.f32 %v1097, %v1063
    %v1118 = vmin.f32 %v1098, %v1064
    %v1119 = vmax.f32 %v1097, %v1063
    %v1120 = vmax.f32 %v1098, %v1064
    %v1121 = vmin.f32 %v1099, %v1065
    %v1122 = vmin.f32 %v1100, %v1066
    %v1123 = vmax.f32 %v1099, %v1065
    %v1124 = vmax.f32 %v1100, %v1066
    %v1125 = vmin.f32 %v1101, %v1067
    %v1126 = vmin.f32 %v1102, %v1068
    %v1127 = vmax.f32 %v1101, %v1067
    %v1128 = vmax.f32 %v1102, %v1068
    %v1129 = vmin.f32 %v1103, %v1051
    %v1130 = vmin.f32 %v1104, %v1052
    %v1131 = vmax.f32 %v1103, %v1051
    %v1132 = vmax.f32 %v1104, %v1052
    %v1133 = vmin.f32 %v1033, %v127
    %v1134 = vmin.f32 %v1034, %v128
    %v1135 = vmax.f32 %v1033, %v127
    %v1136 = vmax.f32 %v1034, %v128
    %v1137 = vmin.f32 %v1119, %v1135
    %v1138 = vmin.f32 %v1120, %v1136
    %v1139 = vmax.f32 %v1119, %v1135
    %v1140 = vmax.f32 %v1120, %v1136
    %v1141 = vmin.f32 %v1111, %v1137
    %v1142 = vmin.f32 %v1112, %v1138
    %v1143 = vmax.f32 %v1111, %v1137
    %v1144 = vmax.f32 %v1112, %v1138
    %v1145 = vmin.f32 %v1127, %v1139
    %v1146 = vmin.f32 %v1128, %v1140
    %v1147 = vmax.f32 %v1127, %v1139
    %v1148 = vmax.f32 %v1128, %v1140
    %v1149 = vmin.f32 %v1115, %v1123
    %v1150 = vmin.f32 %v1116, %v1124
    %v1151 = vmax.f32 %v1115, %v1123
    %v1152 = vmax.f32 %v1116, %v1124
    %v1153 = vmin.f32 %v1107, %v1141
    %v1154 = vmin.f32 %v1108, %v1142
    %v1155 = vmax.f32 %v1107, %v1141
    %v1156 = vmax.f32 %v1108, %v1142
    %v1157 = vmin.f32 %v1149, %v1143
    %v1158 = vmin.f32 %v1150, %v1144
    %v1159 = vmax.f32 %v1149, %v1143
    %v1160 = vmax.f32 %v1150, %v1144
    %v1161 = vmin.f32 %v1151, %v1145
    %v1162 = vmin.f32 %v1152, %v1146
    %v1163 = vmax.f32 %v1151, %v1145
    %v1164 = vmax.f32 %v1152, %v1146
    %v1165 = vmin.f32 %v1131, %v1147
    %v1166 = vmin.f32 %v1132, %v1148
    %v1167 = vmax.f32 %v1131, %v1147
    %v1168 = vmax.f32 %v1132, %v1148
    %v1169 = vmin.f32 %v1113, %v1121
    %v1170 = vmin.f32 %v1114, %v1122
    %v1171 = vmax.f32 %v1113, %v1121
    %v1172 = vmax.f32 %v1114, %v1122
    %v1173 = vmin.f32 %v1117, %v1125
    %v1174 = vmin.f32 %v1118, %v1126
    %v1175 = vmax.f32 %v1117, %v1125
    %v1176 = vmax.f32 %v1118, %v1126
    %v1177 = vmin.f32 %v1109, %v1169
    %v1178 = vmin.f32 %v1110, %v1170
    %v1179 = vmax.f32 %v1109, %v1169
    %v1180 = vmax.f32 %v1110, %v1170
    %v1181 = vmin.f32 %v1173, %v1171
    %v1182 = vmin.f32 %v1174, %v1172
    %v1183 = vmax.f32 %v1173, %v1171
    %v1184 = vmax.f32 %v1174, %v1172
    %v1185 = vmin.f32 %v1175, %v1129
    %v1186 = vmin.f32 %v1176, %v1130
    %v1187 = vmax.f32 %v1175, %v1129
    %v1188 = vmax.f32 %v1176, %v1130
    %v1189 = vmin.f32 %v1105, %v1153
    %v1190 = vmin.f32 %v1106, %v1154
    %v1191 = vmax.f32 %v1105, %v1153
    %v1192 = vmax.f32 %v1106, %v1154
    %v1193 = vmin.f32 %v1177, %v1155
    %v1194 = vmin.f32 %v1178, %v1156
    %v1195 = vmax.f32 %v1177, %v1155
    %v1196 = vmax.f32 %v1178, %v1156
    %v1197 = vmin.f32 %v1179, %v1157
    %v1198 = vmin.f32 %v1180, %v1158
    %v1199 = vmax.f32 %v1179, %v1157
    %v1200 = vmax.f32 %v1180, %v1158
    %v1201 = vmin.f32 %v1181, %v1159
    %v1202 = vmin.f32 %v1182, %v1160
    %v1203 = vmax.f32 %v1181, %v1159
    %v1204 = vmax.f32 %v1182, %v1160
    %v1205 = vmin.f32 %v1183, %v1161
    %v1206 = vmin.f32 %v1184, %v1162
    %v1207 = vmax.f32 %v1183, %v1161
    %v1208 = vmax.f32 %v1184, %v1162
    %v1209 = vmin.f32 %v1185, %v1163
    %v1210 = vmin.f32 %v1186, %v1164
    %v1211 = vmax.f32 %v1185, %v1163
    %v1212 = vmax.f32 %v1186, %v1164
    %v1213 = vmin.f32 %v1187, %v1165
    %v1214 = vmin.f32 %v1188, %v1166
    %v1215 = vmax.f32 %v1187, %v1165
    %v1216 = vmax.f32 %v1188, %v1166
    %v1217 = vmin.f32 %v1087, %v1167
    %v1218 = vmin.f32 %v1088, %v1168
    %v1219 = vmax.f32 %v1087, %v1167
    %v1220 = vmax.f32 %v1088, %v1168
    %v1221 = vmax.f32 %v633, %v1133
    %v1222 = vmax.f32 %v634, %v1134
    %v1223 = vmin.f32 %v857, %v1219
    %v1224 = vmin.f32 %v858, %v1220
    %v1225 = vmax.f32 %v1223, %v1221
    %v1226 = vmax.f32 %v1224, %v1222
    %v1227 = vmax.f32 %v841, %v1203
    %v1228 = vmax.f32 %v842, %v1204
    %v1229 = vmin.f32 %v873, %v1227
    %v1230 = vmin.f32 %v874, %v1228
    %v1231 = vmin.f32 %v1229, %v1225
    %v1232 = vmin.f32 %v1230, %v1226
    %v1233 = vmax.f32 %v833, %v1195
    %v1234 = vmax.f32 %v834, %v1196
    %v1235 = vmin.f32 %v865, %v1233
    %v1236 = vmin.f32 %v866, %v1234
    %v1237 = vmin.f32 %v849, %v1211
    %v1238 = vmin.f32 %v850, %v1212
    %v1239 = vmax.f32 %v1237, %v1235
    %v1240 = vmax.f32 %v1238, %v1236
    %v1241 = vmax.f32 %v1239, %v1231
    %v1242 = vmax.f32 %v1240, %v1232
    %v1243 = vmax.f32 %v829, %v1191
    %v1244 = vmax.f32 %v830, %v1192
    %v1245 = vmax.f32 %v861, %v1243
    %v1246 = vmax.f32 %v862, %v1244
    %v1247 = vmax.f32 %v845, %v1207
    %v1248 = vmax.f32 %v846, %v1208
    %v1249 = vmin.f32 %v877, %v1247
    %v1250 = vmin.f32 %v878, %v1248
    %v1251 = vmin.f32 %v1249, %v1245
    %v1252 = vmin.f32 %v1250, %v1246
    %v1253 = vmax.f32 %v837, %v1199
    %v1254 = vmax.f32 %v838, %v1200
    %v1255 = vmin.f32 %v869, %v1253
    %v1256 = vmin.f32 %v870, %v1254
    %v1257 = vmin.f32 %v853, %v1215
    %v1258 = vmin.f32 %v854, %v1216
    %v1259 = vmax.f32 %v1257, %v1255
    %v1260 = vmax.f32 %v1258, %v1256
    %v1261 = vmin.f32 %v1259, %v1251
    %v1262 = vmin.f32 %v1260, %v1252
    %v1263 = vmax.f32 %v1261, %v1241
    %v1264 = vmax.f32 %v1262, %v1242
    %v1265 = vmax.f32 %v827, %v1189
    %v1266 = vmax.f32 %v828, %v1190
    %v1267 = vmax.f32 %v859, %v1265
    %v1268 = vmax.f32 %v860, %v1266
    %v1269 = vmax.f32 %v843, %v1205
    %v1270 = vmax.f32 %v844, %v1206
    %v1271 = vmin.f32 %v875, %v1269
    %v1272 = vmin.f32 %v876, %v1270
    %v1273 = vmin.f32 %v1271, %v1267
    %v1274 = vmin.f32 %v1272, %v1268
    %v1275 = vmax.f32 %v835, %v1197
    %v1276 = vmax.f32 %v836, %v1198
    %v1277 = vmin.f32 %v867, %v1275
    %v1278 = vmin.f32 %v868, %v1276
    %v1279 = vmin.f32 %v851, %v1213
    %v1280 = vmin.f32 %v852, %v1214
    %v1281 = vmax.f32 %v1279, %v1277
    %v1282 = vmax.f32 %v1280, %v1278
    %v1283 = vmax.f32 %v1281, %v1273
    %v1284 = vmax.f32 %v1282, %v1274
    %v1285 = vmax.f32 %v831, %v1193
    %v1286 = vmax.f32 %v832, %v1194
    %v1287 = vmax.f32 %v863, %v1285
    %v1288 = vmax.f32 %v864, %v1286
    %v1289 = vmax.f32 %v847, %v1209
    %v1290 = vmax.f32 %v848, %v1210
    %v1291 = vmin.f32 %v879, %v1289
    %v1292 = vmin.f32 %v880, %v1290
    %v1293 = vmin.f32 %v1291, %v1287
    %v1294 = vmin.f32 %v1292, %v1288
    %v1295 = vmax.f32 %v839, %v1201
    %v1296 = vmax.f32 %v840, %v1202
    %v1297 = vmin.f32 %v871, %v1295
    %v1298 = vmin.f32 %v872, %v1296
    %v1299 = vmin.f32 %v855, %v1217
    %v1300 = vmin.f32 %v856, %v1218
    %v1301 = vmax.f32 %v1299, %v1297
    %v1302 = vmax.f32 %v1300, %v1298
    %v1303 = vmin.f32 %v1301, %v1293
    %v1304 = vmin.f32 %v1302, %v1294
    %v1305 = vmin.f32 %v1303, %v1283
    %v1306 = vmin.f32 %v1304, %v1284
    %v1307 = vmax.f32 %v1305, %v1263
    %v1308 = vmax.f32 %v1306, %v1264
    %vm1309 = vcmask 392192
    %1310 = vst.msk [vmem:[#allocation5] sm:$0xff] %vm1309, %v1307
    %1311 = vst.msk [vmem:[#allocation5 + $0x8] sm:$0xff] %vm1309, %v1308
    // Predicated region
    $region10: #{tpu_custom_call.1} parent=1 // pred_check
      _
    $region11: #{tpu_custom_call.1} parent=1 // pred_check_branch
      %1313 = sbr.rel (0) target = $region13
    $region12: #{tpu_custom_call.1} parent=1 // pred_region
      %1315 = vsyncadd [#allocation4], 0
      %s1316 = sshll.u32 [#allocation5], 4
      %s1317 = int_to_ptr.vmem [resolvable:$true] %s1316
      %s1318 = sshll.u32 %s1, 4
      %s1319 = int_to_ptr.hbm [resolvable:$true] %s1318
      %1324 = dma.vmem_to_hbm [thread:$0]  %s1317, 256, %s1319, [#allocation4], 128, 128, 8
    $region13: #{tpu_custom_call.1} parent=1 // pred_fallthru
      _
    // Predicated region
    $region14: #{tpu_custom_call.1} parent=1 // pred_check
      _
    $region15: #{tpu_custom_call.1} parent=1 // pred_check_branch
      %1326 = sbr.rel (0) target = $region17
    $region16: #{tpu_custom_call.1} parent=1 // pred_region
      %1328 = dma.done [#allocation4], 256
    $region17: #{tpu_custom_call.1} parent=1 // pred_fallthru
      _
    %1329 = vsyncpa [#allocation3], 1
    %1330 = vsyncpa [#allocation4], 1

</llo_original>
